<compile_context>
chip_gen: v5e
topology: v5e:2x2
jax: 0.10.0
libtpu: 0.0.40
codegen_flags: <defaults>
</compile_context>

<pallas_src>
import jax
import jax.numpy as jnp
from jax.experimental import pallas as pl
from jax.experimental.pallas import tpu as pltpu

_LANE_PAD = 128  # pad the weight's out_features up to one full vreg lane width


def _linear_relu_sigmoid_kernel(x_ref, w_ref, o_ref):
    # (tile_n, 768) @ (768, 128) on the MXU; f32 accumulation, multi-pass f32
    # precision so the result matches the f32 reference to ~1e-6.
    y = jnp.dot(
        x_ref[...],
        w_ref[...],
        preferred_element_type=jnp.float32,
        precision=jax.lax.Precision.HIGHEST,
    )
    # Epilogue only on the live output lanes; padded lanes are never stored.
    y = y[:, : o_ref.shape[1]]
    y = jnp.maximum(y, 0.0)   # ReLU   (VPU)
    y = jax.nn.sigmoid(y)     # Sigmoid (EUP)
    o_ref[...] = y.astype(o_ref.dtype)


def linear_forward(x, w, *, tile_n=1024):
    """x: (N, C, L) float32; w: (in_features, out_features) float32."""
    n = x.shape[0]
    in_features, out_features = w.shape

    # Row-major flatten, identical to torch's x.reshape(len(x), -1).
    x_flat = x.reshape(n, -1)
    assert x_flat.shape[1] == in_features

    # Batch tile: multiple of 8 sublanes.  Cap so large batches give >= 4 grid
    # blocks (v7x 2-TC split + pipelining); tiny batches just round up to 8.
    tile_n = max(8, min(tile_n, ((pl.cdiv(n, 4) + 7) // 8) * 8))
    grid = (pl.cdiv(n, tile_n),)  # ragged last block handled by Pallas

    # Lane-dense weight for the MXU: zero-pad out_features -> 128 lanes.
    # Constant block index below -> one DMA total, VMEM-resident thereafter.
    w_pad = jnp.zeros((in_features, _LANE_PAD), dtype=w.dtype)
    w_pad = w_pad.at[:, :out_features].set(w)

    cost = pl.CostEstimate(
        flops=2 * n * in_features * _LANE_PAD,
        transcendentals=n * out_features,
        bytes_accessed=(
            n * in_features * 4            # stream x
            + in_features * _LANE_PAD * 4  # weight, once
            + n * out_features * 4         # narrow output
        ),
    )

    return pl.pallas_call(
        _linear_relu_sigmoid_kernel,
        out_shape=jax.ShapeDtypeStruct((n, out_features), jnp.float32),
        grid_spec=pltpu.PrefetchScalarGridSpec(
            num_scalar_prefetch=0,
            grid=grid,
            in_specs=[
                # x streams tile-by-tile over the batch axis (double-buffered).
                pl.BlockSpec((tile_n, in_features), lambda i: (i, 0)),
                # weight: constant block index -> loaded into VMEM once.
                pl.BlockSpec((in_features, _LANE_PAD), lambda i: (0, 0)),
            ],
            # Narrow output block: last dim == full array dim (legal), rows
            # tiled like x.  OOB rows of the ragged last block are masked.
            out_specs=pl.BlockSpec((tile_n, out_features), lambda i: (i, 0)),
        ),
        compiler_params=pltpu.CompilerParams(
            dimension_semantics=("parallel",),  # independent row tiles
        ),
        cost_estimate=cost,
    )(x_flat, w_pad)


if __name__ == "__main__":
    key = jax.random.PRNGKey(0)
    k_x, k_w = jax.random.split(key)

    # Flatten must give 128*6 = 768 (the Linear's in_features).  N=10 is
    # deliberately NOT a multiple of the tile so the ragged-last-block path
    # (no wrapper pad, masked output store) is exercised.
    N, C, L = 10, 128, 6
    x = jax.random.normal(k_x, (N, C, L), dtype=jnp.float32)

    # nn.Linear(768, 2, bias=False): torch weight is (out=2, in=768); store
    # transposed so the kernel computes x @ W.
    in_features, out_features = C * L, 2
    bound = 1.0 / (in_features ** 0.5)
    w_torch_layout = jax.random.uniform(
        k_w, (out_features, in_features), minval=-bound, maxval=bound,
        dtype=jnp.float32)
    w = w_torch_layout.T  # (768, 2)

    out = linear_forward(x, w)
    jax.block_until_ready(out)

    # Reference check in plain JAX (f32 end-to-end, tight tolerance holds).
    ref = jax.nn.sigmoid(jnp.maximum(x.reshape(N, -1) @ w, 0.0))
    assert out.shape == (N, out_features)
    assert jnp.allclose(out, ref, atol=1e-5, rtol=1e-5)

    print("KERNEL_OK")
</pallas_src>

<mosaic_0001>
module attributes {stable_mosaic.version = 11 : i64} {
  func.func @_linear_relu_sigmoid_kernel(%arg0: i32, %arg1: memref<8x768xf32, #tpu.memory_space<vmem>>, %arg2: memref<768x128xf32, #tpu.memory_space<vmem>>, %arg3: memref<8x2xf32, #tpu.memory_space<vmem>>) attributes {dimension_semantics = [#tpu.dimension_semantics<parallel>], iteration_bounds = array<i64: 2>, scalar_prefetch = 0 : i64, scratch_operands = 0 : i64, tpu.core_type = #tpu.core_type<tc>, window_params = [{transform_indices = @transform_0, window_bounds = array<i64: 8, 768>}, {pipeline_mode = #tpu.pipeline_mode<synchronous>, transform_indices = @transform_1, window_bounds = array<i64: 768, 128>}, {transform_indices = @transform_2, window_bounds = array<i64: 8, 2>}]} {
    %c0 = arith.constant 0 : index
    %c0_0 = arith.constant 0 : index
    %0 = vector.load %arg1[%c0, %c0_0] : memref<8x768xf32, #tpu.memory_space<vmem>>, vector<8x768xf32>
    %c0_1 = arith.constant 0 : index
    %c0_2 = arith.constant 0 : index
    %1 = vector.load %arg2[%c0_1, %c0_2] : memref<768x128xf32, #tpu.memory_space<vmem>>, vector<768x128xf32>
    %cst = arith.constant dense<0.000000e+00> : vector<8x128xf32>
    %2 = tpu.matmul %0, %1, %cst {dimension_numbers = #tpu.dot_dimension_numbers<[1], [0], [0], [1], [0, 0, 1, 1], [], []>, precision = #tpu.contract_precision<fp32>} : vector<8x768xf32>, vector<768x128xf32>, vector<8x128xf32> -> vector<8x128xf32>
    %3 = vector.extract_strided_slice %2 {offsets = [0, 0], sizes = [8, 2], strides = [1, 1]} : vector<8x128xf32> to vector<8x2xf32>
    %cst_3 = arith.constant 0.000000e+00 : f32
    %4 = vector.broadcast %cst_3 : f32 to vector<8x2xf32>
    %5 = arith.maximumf %3, %4 : vector<8x2xf32>
    %6 = arith.negf %5 : vector<8x2xf32>
    %7 = math.exp %6 : vector<8x2xf32>
    %cst_4 = arith.constant 1.000000e+00 : f32
    %8 = vector.broadcast %cst_4 : f32 to vector<8x2xf32>
    %9 = arith.addf %8, %7 : vector<8x2xf32>
    %10 = arith.divf %8, %9 : vector<8x2xf32>
    %c0_5 = arith.constant 0 : index
    %c0_6 = arith.constant 0 : index
    %11 = vector.load %arg3[%c0_5, %c0_6] : memref<8x2xf32, #tpu.memory_space<vmem>>, vector<8x2xf32>
    tpu.vector_store %arg3[%c0_5, %c0_6], %10 {strides = array<i32>} : memref<8x2xf32, #tpu.memory_space<vmem>>, vector<8x2xf32>,
    return
  }
  func.func @transform_0(%arg0: i32) -> (i32, i32) {
    %c0_i32 = arith.constant 0 : i32
    %c0_i32_0 = arith.constant 0 : i32
    return %arg0, %c0_i32 : i32, i32
  }
  func.func @transform_1(%arg0: i32) -> (i32, i32) {
    %c0_i32 = arith.constant 0 : i32
    %c0_i32_0 = arith.constant 0 : i32
    %c0_i32_1 = arith.constant 0 : i32
    return %c0_i32, %c0_i32_0 : i32, i32
  }
  func.func @transform_2(%arg0: i32) -> (i32, i32) {
    %c0_i32 = arith.constant 0 : i32
    %c0_i32_0 = arith.constant 0 : i32
    return %arg0, %c0_i32 : i32, i32
  }
}

</mosaic_0001>

<llo_original>
// kernel: tpu_custom_call.1
$region0: #{tpu_custom_call.1}
  #allocation0 [shape = 'u32[]', space=smem, size = 0x4, offset = 0x4, fixed_abs, tag = 'smem constant byte address 0x4 - core index']
  #allocation1 [shape = 'u32[72,128]{1,0:T(1,128)}', space=vmem, size = 0x9000, scoped, tag = 'internal scratch']
  %s0 = inlined_call_operand.hbm [shape: f32[10,768], index: 0, kind: input, shape index: {}]
  %s1 = inlined_call_operand.hbm [shape: f32[768,128], index: 1, kind: input, shape index: {}]
  %s2 = inlined_call_operand.vmem [shape: f32[10,2], index: 2, kind: output, shape index: {}]
  %s3 = sld [smem:[#allocation0]]
  $region49: #{tpu_custom_call.1} parent=0
    _
  %s5 = ssub.s32 1, %s3
  %s6 = scalar_select 0, %s5, %s3
  $region1: #{tpu_custom_call.1} parent=0
    #allocation2 [shape = 'u8[49152]{0}', space=vmem, size = 0xc000, scoped, tag = 'input window, operand 0']
    #allocation3 [shape = 's32[2]{0}', space=sflag, size = 0x8, scoped, tag = 'scoped memory for tpu_custom_call.1']
    #allocation4 [shape = 'u8[393216]{0}', space=vmem, size = 0x60000, scoped, tag = 'input window, operand 1, single buffered']
    #allocation5 [shape = 's32[1]{0}', space=sflag, size = 0x4, scoped, tag = 'scoped memory for tpu_custom_call.1']
    %7 = vsyncpa [#allocation3], 0
    %s8 = scalar_lea.sflag [#allocation3], 1
    %9 = vsyncpa %s8, 0
    %10 = vsyncpa [#allocation5], 0
    loop: start=0, step=1, limit=4
    $region2: #{tpu_custom_call.1} parent=1 // loop_pre_header
      _
    $region3: #{tpu_custom_call.1} parent=1 // loop_header
      %s12 = sphi 0, %s16
      %p13 = scmp.ge.s32.totalorder %s12, 4
      %s22 = sphi 0, %s24
      %s25 = sphi 0, %s22
      %s26 = sphi 0, %s25
      %s42 = sphi 0, %s26
      %s46 = sphi 0, %s46
      %s48 = sphi 0, %s46
      %s49 = sphi 0, %s48
      %s63 = sphi 0, %s49
      %s69 = sphi 0, %s71
      %s72 = sphi 0, %s69
      %s73 = sphi 0, %s72
      %s89 = sphi 0, %s73
    $region4: #{tpu_custom_call.1} parent=1 // loop_header_branch
      %15 = sbr.rel (%p13) target = $region8
    $region5: #{tpu_custom_call.1} parent=1 // loop_body
      %s17 = ssub.s32 %s12, 1
      %s18 = ssub.s32 %s12, 2
      %s19 = sadd.s32 %s12, 1
      %s20 = ssub.s32 %s12, %s19
      %p21 = scmp.eq.s32.totalorder %s20, 0
      %s23 = sadd.s32 %s22, 1
      %s24 = scalar_select %p21, %s22, %s23
      %p27 = pneg %p21
      %p28 = scmp.eq.s32.totalorder %s12, 1
      %p29 = por %p27, %p28
      %p30 = scmp.ne.s32.totalorder %s22, %s25
      %p31 = scmp.eq.s32.totalorder %s12, 0
      %p32 = por %p30, %p31
      %p33 = scmp.ne.s32.totalorder %s22, %s25
      %p34 = scmp.eq.s32.totalorder %s17, 1
      %p35 = por %p33, %p34
      %p36 = scmp.ne.s32.totalorder %s25, %s26
      %p37 = scmp.eq.s32.totalorder %s17, 0
      %p38 = por %p36, %p37
      %p39 = scmp.ne.s32.totalorder %s25, %s26
      %p40 = scmp.eq.s32.totalorder %s18, 1
      %p41 = por %p39, %p40
      %p43 = scmp.ne.s32.totalorder %s26, %s42
      %p44 = scmp.eq.s32.totalorder %s18, 0
      %p45 = por %p43, %p44
      %s47 = sadd.s32 %s46, 1
      %p50 = scmp.eq.s32.totalorder %s12, 1
      %p51 = scmp.ne.s32.totalorder %s46, %s48
      %p52 = scmp.eq.s32.totalorder %s12, 0
      %p53 = por %p51, %p52
      %p54 = scmp.ne.s32.totalorder %s46, %s48
      %p55 = scmp.eq.s32.totalorder %s17, 1
      %p56 = por %p54, %p55
      %p57 = scmp.ne.s32.totalorder %s48, %s49
      %p58 = scmp.eq.s32.totalorder %s17, 0
      %p59 = por %p57, %p58
      %p60 = scmp.ne.s32.totalorder %s48, %s49
      %p61 = scmp.eq.s32.totalorder %s18, 1
      %p62 = por %p60, %p61
      %p64 = scmp.ne.s32.totalorder %s49, %s63
      %p65 = scmp.eq.s32.totalorder %s18, 0
      %p66 = por %p64, %p65
      %s67 = ssub.s32 %s12, %s19
      %p68 = scmp.eq.s32.totalorder %s67, 0
      %s70 = sadd.s32 %s69, 1
      %s71 = scalar_select %p68, %s69, %s70
      %p74 = pneg %p68
      %p75 = scmp.eq.s32.totalorder %s12, 1
      %p76 = por %p74, %p75
      %p77 = scmp.ne.s32.totalorder %s69, %s72
      %p78 = scmp.eq.s32.totalorder %s12, 0
      %p79 = por %p77, %p78
      %p80 = scmp.ne.s32.totalorder %s69, %s72
      %p81 = scmp.eq.s32.totalorder %s17, 1
      %p82 = por %p80, %p81
      %p83 = scmp.ne.s32.totalorder %s72, %s73
      %p84 = scmp.eq.s32.totalorder %s17, 0
      %p85 = por %p83, %p84
      %p86 = scmp.ne.s32.totalorder %s72, %s73
      %p87 = scmp.eq.s32.totalorder %s18, 1
      %p88 = por %p86, %p87
      %p90 = scmp.ne.s32.totalorder %s73, %s89
      %p91 = scmp.eq.s32.totalorder %s18, 0
      %p92 = por %p90, %p91
      %p93 = scmp.le.s32.totalorder 1, %s12
      %p94 = scmp.lt.s32.totalorder %s12, 3
      %p95 = pnand %p93, %p94
      %p96 = pneg %p95
      // Predicated region
      $region9: #{tpu_custom_call.1} parent=5 // pred_check
        _
      $region10: #{tpu_custom_call.1} parent=5 // pred_check_branch
        %98 = sbr.rel (%p95) target = $region12
      $region11: #{tpu_custom_call.1} parent=5 // pred_region
        %s99 = ssub.s32 %s12, 1
        // Predicated region
        $region13: #{tpu_custom_call.1} parent=11 // pred_check
          %p100 = pneg %p59
        $region14: #{tpu_custom_call.1} parent=11 // pred_check_branch
          %102 = sbr.rel (%p100) target = $region16
        $region15: #{tpu_custom_call.1} parent=11 // pred_region
          %104 = vsyncadd [#allocation5], 0
          %s105 = sshll.u32 %s1, 4
          %s106 = int_to_ptr.hbm [resolvable:$true] %s105
          %s107 = sshll.u32 [#allocation4], 4
          %s108 = int_to_ptr.vmem [resolvable:$true] %s107
          %113 = dma.hbm_to_vmem [thread:$0]  %s106, 12288, %s108, [#allocation5], 128, 128, 8
        $region16: #{tpu_custom_call.1} parent=11 // pred_fallthru
          _
      $region12: #{tpu_custom_call.1} parent=5 // pred_fallthru
        _
      %p114 = scmp.lt.s32.totalorder %s12, 2
      // Predicated region
      $region17: #{tpu_custom_call.1} parent=5 // pred_check
        %p115 = pneg %p114
      $region18: #{tpu_custom_call.1} parent=5 // pred_check_branch
        %117 = sbr.rel (%p115) target = $region20
      $region19: #{tpu_custom_call.1} parent=5 // pred_region
        // Predicated region
        $region21: #{tpu_custom_call.1} parent=19 // pred_check
          %p118 = pneg %p32
        $region22: #{tpu_custom_call.1} parent=19 // pred_check_branch
          %120 = sbr.rel (%p118) target = $region24
        $region23: #{tpu_custom_call.1} parent=19 // pred_region
          %s121 = sand.u32 %s22, 1
          %s122 = scalar_lea.sflag [#allocation3], %s121
          %s123 = sand.u32 %s22, 1
          %s124 = smul.addr %s123, 48
          %s125 = scalar_lea.vmem [#allocation2], %s124
          %127 = vsyncadd %s122, 0
          %s128 = smul.addr %s12, 6
          %s129 = smul.addr %s128, 8
          %s130 = scalar_lea.hbm %s0, %s129
          %s132 = sshll.u32 %s130, 4
          %s133 = int_to_ptr.hbm [resolvable:$true] %s132
          %s134 = sshll.u32 %s125, 4
          %s135 = int_to_ptr.vmem [resolvable:$true] %s134
          %137 = dma.hbm_to_vmem [thread:$0]  %s133, 768, %s135, %s122
        $region24: #{tpu_custom_call.1} parent=19 // pred_fallthru
          _
      $region20: #{tpu_custom_call.1} parent=5 // pred_fallthru
        _
      %p138 = scmp.le.s32.totalorder 1, %s12
      %p139 = scmp.lt.s32.totalorder %s12, 3
      %p140 = pnand %p138, %p139
      %p141 = pneg %p140
      // Predicated region
      $region25: #{tpu_custom_call.1} parent=5 // pred_check
        _
      $region26: #{tpu_custom_call.1} parent=5 // pred_check_branch
        %143 = sbr.rel (%p140) target = $region28
      $region27: #{tpu_custom_call.1} parent=5 // pred_region
        %s144 = ssub.s32 %s12, 1
        %s145 = sand.u32 %s25, 1
        %s146 = scalar_lea.sflag [#allocation3], %s145
        %s147 = sand.u32 %s25, 1
        %s148 = smul.addr %s147, 48
        %s149 = scalar_lea.vmem [#allocation2], %s148
        // Predicated region
        $region29: #{tpu_custom_call.1} parent=27 // pred_check
          %p150 = pneg %p38
        $region30: #{tpu_custom_call.1} parent=27 // pred_check_branch
          %152 = sbr.rel (%p150) target = $region32
        $region31: #{tpu_custom_call.1} parent=27 // pred_region
          %154 = dma.done %s146, 768
        $region32: #{tpu_custom_call.1} parent=27 // pred_fallthru
          _
        // Predicated region
        $region33: #{tpu_custom_call.1} parent=27 // pred_check
          %p155 = pneg %p59
        $region34: #{tpu_custom_call.1} parent=27 // pred_check_branch
          %157 = sbr.rel (%p155) target = $region36
        $region35: #{tpu_custom_call.1} parent=27 // pred_region
          %159 = dma.done [#allocation5], 12288
        $region36: #{tpu_custom_call.1} parent=27 // pred_fallthru
          _
        %s160 = sand.u32 %s25, 1
        %s161 = scalar_lea.sflag [#allocation3], %s160
        %s162 = sand.u32 %s25, 1
        %s163 = smul.addr %s162, 48
        %s164 = scalar_lea.vmem [#allocation2], %s163
        %p165 = pneg %p38
        %p166 = pneg %p35
        %p167 = pneg %p59
        %p168 = pneg %p56
        %p169 = pneg %p85
        %p170 = pneg %p82
        %p171 = scmp.lt.s32.totalorder %s17, 1
        %s172 = scalar_select %p171, %s17, 1
        %s173 = smul.addr %s172, 8
        %s174 = scalar_lea.vmem %s2, %s173
        %p175 = scmp.lt.s32.totalorder %s17, 1
        %s176 = scalar_select %p175, %s17, 1
        %s177 = smul.addr %s176, 8
        %s178 = scalar_lea.vmem %s2, %s177
        %v179 = vld [vmem:[%s149] sm:$0xff]
        %v180 = vld [vmem:[%s149 + $0x8] sm:$0xff]
        %v181 = vld [vmem:[%s149 + $0x10] sm:$0xff]
        %v182 = vld [vmem:[%s149 + $0x18] sm:$0xff]
        %v183 = vld [vmem:[%s149 + $0x20] sm:$0xff]
        %v184 = vld [vmem:[%s149 + $0x28] sm:$0xff]
        %v185 = vld [vmem:[#allocation4] sm:$0xff]
        %v186 = vld [vmem:[#allocation4 + $0x8] sm:$0xff]
        %v187 = vld [vmem:[#allocation4 + $0x10] sm:$0xff]
        %v188 = vld [vmem:[#allocation4 + $0x18] sm:$0xff]
        %v189 = vld [vmem:[#allocation4 + $0x20] sm:$0xff]
        %v190 = vld [vmem:[#allocation4 + $0x28] sm:$0xff]
        %v191 = vld [vmem:[#allocation4 + $0x30] sm:$0xff]
        %v192 = vld [vmem:[#allocation4 + $0x38] sm:$0xff]
        %v193 = vld [vmem:[#allocation4 + $0x40] sm:$0xff]
        %v194 = vld [vmem:[#allocation4 + $0x48] sm:$0xff]
        %v195 = vld [vmem:[#allocation4 + $0x50] sm:$0xff]
        %v196 = vld [vmem:[#allocation4 + $0x58] sm:$0xff]
        %v197 = vld [vmem:[#allocation4 + $0x60] sm:$0xff]
        %v198 = vld [vmem:[#allocation4 + $0x68] sm:$0xff]
        %v199 = vld [vmem:[#allocation4 + $0x70] sm:$0xff]
        %v200 = vld [vmem:[#allocation4 + $0x78] sm:$0xff]
        %v201 = vld [vmem:[#allocation4 + $0x80] sm:$0xff]
        %v202 = vld [vmem:[#allocation4 + $0x88] sm:$0xff]
        %v203 = vld [vmem:[#allocation4 + $0x90] sm:$0xff]
        %v204 = vld [vmem:[#allocation4 + $0x98] sm:$0xff]
        %v205 = vld [vmem:[#allocation4 + $0xa0] sm:$0xff]
        %v206 = vld [vmem:[#allocation4 + $0xa8] sm:$0xff]
        %v207 = vld [vmem:[#allocation4 + $0xb0] sm:$0xff]
        %v208 = vld [vmem:[#allocation4 + $0xb8] sm:$0xff]
        %v209 = vld [vmem:[#allocation4 + $0xc0] sm:$0xff]
        %v210 = vld [vmem:[#allocation4 + $0xc8] sm:$0xff]
        %v211 = vld [vmem:[#allocation4 + $0xd0] sm:$0xff]
        %v212 = vld [vmem:[#allocation4 + $0xd8] sm:$0xff]
        %v213 = vld [vmem:[#allocation4 + $0xe0] sm:$0xff]
        %v214 = vld [vmem:[#allocation4 + $0xe8] sm:$0xff]
        %v215 = vld [vmem:[#allocation4 + $0xf0] sm:$0xff]
        %v216 = vld [vmem:[#allocation4 + $0xf8] sm:$0xff]
        %v217 = vld [vmem:[#allocation4 + $0x100] sm:$0xff]
        %v218 = vld [vmem:[#allocation4 + $0x108] sm:$0xff]
        %v219 = vld [vmem:[#allocation4 + $0x110] sm:$0xff]
        %v220 = vld [vmem:[#allocation4 + $0x118] sm:$0xff]
        %v221 = vld [vmem:[#allocation4 + $0x120] sm:$0xff]
        %v222 = vld [vmem:[#allocation4 + $0x128] sm:$0xff]
        %v223 = vld [vmem:[#allocation4 + $0x130] sm:$0xff]
        %v224 = vld [vmem:[#allocation4 + $0x138] sm:$0xff]
        %v225 = vld [vmem:[#allocation4 + $0x140] sm:$0xff]
        %v226 = vld [vmem:[#allocation4 + $0x148] sm:$0xff]
        %v227 = vld [vmem:[#allocation4 + $0x150] sm:$0xff]
        %v228 = vld [vmem:[#allocation4 + $0x158] sm:$0xff]
        %v229 = vld [vmem:[#allocation4 + $0x160] sm:$0xff]
        %v230 = vld [vmem:[#allocation4 + $0x168] sm:$0xff]
        %v231 = vld [vmem:[#allocation4 + $0x170] sm:$0xff]
        %v232 = vld [vmem:[#allocation4 + $0x178] sm:$0xff]
        %v233 = vld [vmem:[#allocation4 + $0x180] sm:$0xff]
        %v234 = vld [vmem:[#allocation4 + $0x188] sm:$0xff]
        %v235 = vld [vmem:[#allocation4 + $0x190] sm:$0xff]
        %v236 = vld [vmem:[#allocation4 + $0x198] sm:$0xff]
        %v237 = vld [vmem:[#allocation4 + $0x1a0] sm:$0xff]
        %v238 = vld [vmem:[#allocation4 + $0x1a8] sm:$0xff]
        %v239 = vld [vmem:[#allocation4 + $0x1b0] sm:$0xff]
        %v240 = vld [vmem:[#allocation4 + $0x1b8] sm:$0xff]
        %v241 = vld [vmem:[#allocation4 + $0x1c0] sm:$0xff]
        %v242 = vld [vmem:[#allocation4 + $0x1c8] sm:$0xff]
        %v243 = vld [vmem:[#allocation4 + $0x1d0] sm:$0xff]
        %v244 = vld [vmem:[#allocation4 + $0x1d8] sm:$0xff]
        %v245 = vld [vmem:[#allocation4 + $0x1e0] sm:$0xff]
        %v246 = vld [vmem:[#allocation4 + $0x1e8] sm:$0xff]
        %v247 = vld [vmem:[#allocation4 + $0x1f0] sm:$0xff]
        %v248 = vld [vmem:[#allocation4 + $0x1f8] sm:$0xff]
        %v249 = vld [vmem:[#allocation4 + $0x200] sm:$0xff]
        %v250 = vld [vmem:[#allocation4 + $0x208] sm:$0xff]
        %v251 = vld [vmem:[#allocation4 + $0x210] sm:$0xff]
        %v252 = vld [vmem:[#allocation4 + $0x218] sm:$0xff]
        %v253 = vld [vmem:[#allocation4 + $0x220] sm:$0xff]
        %v254 = vld [vmem:[#allocation4 + $0x228] sm:$0xff]
        %v255 = vld [vmem:[#allocation4 + $0x230] sm:$0xff]
        %v256 = vld [vmem:[#allocation4 + $0x238] sm:$0xff]
        %v257 = vld [vmem:[#allocation4 + $0x240] sm:$0xff]
        %v258 = vld [vmem:[#allocation4 + $0x248] sm:$0xff]
        %v259 = vld [vmem:[#allocation4 + $0x250] sm:$0xff]
        %v260 = vld [vmem:[#allocation4 + $0x258] sm:$0xff]
        %v261 = vld [vmem:[#allocation4 + $0x260] sm:$0xff]
        %v262 = vld [vmem:[#allocation4 + $0x268] sm:$0xff]
        %v263 = vld [vmem:[#allocation4 + $0x270] sm:$0xff]
        %v264 = vld [vmem:[#allocation4 + $0x278] sm:$0xff]
        %v265 = vld [vmem:[#allocation4 + $0x280] sm:$0xff]
        %v266 = vld [vmem:[#allocation4 + $0x288] sm:$0xff]
        %v267 = vld [vmem:[#allocation4 + $0x290] sm:$0xff]
        %v268 = vld [vmem:[#allocation4 + $0x298] sm:$0xff]
        %v269 = vld [vmem:[#allocation4 + $0x2a0] sm:$0xff]
        %v270 = vld [vmem:[#allocation4 + $0x2a8] sm:$0xff]
        %v271 = vld [vmem:[#allocation4 + $0x2b0] sm:$0xff]
        %v272 = vld [vmem:[#allocation4 + $0x2b8] sm:$0xff]
        %v273 = vld [vmem:[#allocation4 + $0x2c0] sm:$0xff]
        %v274 = vld [vmem:[#allocation4 + $0x2c8] sm:$0xff]
        %v275 = vld [vmem:[#allocation4 + $0x2d0] sm:$0xff]
        %v276 = vld [vmem:[#allocation4 + $0x2d8] sm:$0xff]
        %v277 = vld [vmem:[#allocation4 + $0x2e0] sm:$0xff]
        %v278 = vld [vmem:[#allocation4 + $0x2e8] sm:$0xff]
        %v279 = vld [vmem:[#allocation4 + $0x2f0] sm:$0xff]
        %v280 = vld [vmem:[#allocation4 + $0x2f8] sm:$0xff]
        %v281 = vand.u32 %v200, 4294901760
        %282 = vmatpush.msra.mxu0 %v281
        %v283 = vand.u32 %v199, 4294901760
        %284 = vmatpush.msra.mxu0 %v283
        %v285 = vand.u32 %v198, 4294901760
        %286 = vmatpush.msra.mxu0 %v285
        %v287 = vand.u32 %v197, 4294901760
        %288 = vmatpush.msra.mxu0 %v287
        %v289 = vand.u32 %v196, 4294901760
        %290 = vmatpush.msra.mxu0 %v289
        %v291 = vand.u32 %v195, 4294901760
        %292 = vmatpush.msra.mxu0 %v291
        %v293 = vand.u32 %v194, 4294901760
        %294 = vmatpush.msra.mxu0 %v293
        %v295 = vand.u32 %v193, 4294901760
        %296 = vmatpush.msra.mxu0 %v295
        %v297 = vand.u32 %v192, 4294901760
        %298 = vmatpush.msra.mxu0 %v297
        %v299 = vand.u32 %v191, 4294901760
        %300 = vmatpush.msra.mxu0 %v299
        %v301 = vand.u32 %v190, 4294901760
        %302 = vmatpush.msra.mxu0 %v301
        %v303 = vand.u32 %v189, 4294901760
        %304 = vmatpush.msra.mxu0 %v303
        %v305 = vand.u32 %v188, 4294901760
        %306 = vmatpush.msra.mxu0 %v305
        %v307 = vand.u32 %v187, 4294901760
        %308 = vmatpush.msra.mxu0 %v307
        %v309 = vand.u32 %v186, 4294901760
        %310 = vmatpush.msra.mxu0 %v309
        %v311 = vand.u32 %v185, 4294901760
        %312 = vmatpush.msra.mxu0 %v311
        %v313 = vand.u32 %v179, 4294901760
        %v314 = vsub.f32 %v179, %v313
        %v315 = vand.u32 %v314, 4294901760
        %v316 = vsub.f32 %v314, %v315
        %v317 = vand.u32 %v316, 4294901760
        %318 = vmatmul.f32.gmra.mxu0 %v317
        %v319 = vpop.f32.mrf.mxu0
        %v320 = vadd.f32 0.0, %v319
        %321 = vdwg.mxu0
        %v322 = vand.u32 %v200, 4294901760
        %v323 = vsub.f32 %v200, %v322
        %v324 = vand.u32 %v323, 4294901760
        %v325 = vsub.f32 %v323, %v324
        %v326 = vand.u32 %v325, 4294901760
        %327 = vmatpush.msra.mxu0 %v326
        %v328 = vand.u32 %v199, 4294901760
        %v329 = vsub.f32 %v199, %v328
        %v330 = vand.u32 %v329, 4294901760
        %v331 = vsub.f32 %v329, %v330
        %v332 = vand.u32 %v331, 4294901760
        %333 = vmatpush.msra.mxu0 %v332
        %v334 = vand.u32 %v198, 4294901760
        %v335 = vsub.f32 %v198, %v334
        %v336 = vand.u32 %v335, 4294901760
        %v337 = vsub.f32 %v335, %v336
        %v338 = vand.u32 %v337, 4294901760
        %339 = vmatpush.msra.mxu0 %v338
        %v340 = vand.u32 %v197, 4294901760
        %v341 = vsub.f32 %v197, %v340
        %v342 = vand.u32 %v341, 4294901760
        %v343 = vsub.f32 %v341, %v342
        %v344 = vand.u32 %v343, 4294901760
        %345 = vmatpush.msra.mxu0 %v344
        %v346 = vand.u32 %v196, 4294901760
        %v347 = vsub.f32 %v196, %v346
        %v348 = vand.u32 %v347, 4294901760
        %v349 = vsub.f32 %v347, %v348
        %v350 = vand.u32 %v349, 4294901760
        %351 = vmatpush.msra.mxu0 %v350
        %v352 = vand.u32 %v195, 4294901760
        %v353 = vsub.f32 %v195, %v352
        %v354 = vand.u32 %v353, 4294901760
        %v355 = vsub.f32 %v353, %v354
        %v356 = vand.u32 %v355, 4294901760
        %357 = vmatpush.msra.mxu0 %v356
        %v358 = vand.u32 %v194, 4294901760
        %v359 = vsub.f32 %v194, %v358
        %v360 = vand.u32 %v359, 4294901760
        %v361 = vsub.f32 %v359, %v360
        %v362 = vand.u32 %v361, 4294901760
        %363 = vmatpush.msra.mxu0 %v362
        %v364 = vand.u32 %v193, 4294901760
        %v365 = vsub.f32 %v193, %v364
        %v366 = vand.u32 %v365, 4294901760
        %v367 = vsub.f32 %v365, %v366
        %v368 = vand.u32 %v367, 4294901760
        %369 = vmatpush.msra.mxu0 %v368
        %v370 = vand.u32 %v192, 4294901760
        %v371 = vsub.f32 %v192, %v370
        %v372 = vand.u32 %v371, 4294901760
        %v373 = vsub.f32 %v371, %v372
        %v374 = vand.u32 %v373, 4294901760
        %375 = vmatpush.msra.mxu0 %v374
        %v376 = vand.u32 %v191, 4294901760
        %v377 = vsub.f32 %v191, %v376
        %v378 = vand.u32 %v377, 4294901760
        %v379 = vsub.f32 %v377, %v378
        %v380 = vand.u32 %v379, 4294901760
        %381 = vmatpush.msra.mxu0 %v380
        %v382 = vand.u32 %v190, 4294901760
        %v383 = vsub.f32 %v190, %v382
        %v384 = vand.u32 %v383, 4294901760
        %v385 = vsub.f32 %v383, %v384
        %v386 = vand.u32 %v385, 4294901760
        %387 = vmatpush.msra.mxu0 %v386
        %v388 = vand.u32 %v189, 4294901760
        %v389 = vsub.f32 %v189, %v388
        %v390 = vand.u32 %v389, 4294901760
        %v391 = vsub.f32 %v389, %v390
        %v392 = vand.u32 %v391, 4294901760
        %393 = vmatpush.msra.mxu0 %v392
        %v394 = vand.u32 %v188, 4294901760
        %v395 = vsub.f32 %v188, %v394
        %v396 = vand.u32 %v395, 4294901760
        %v397 = vsub.f32 %v395, %v396
        %v398 = vand.u32 %v397, 4294901760
        %399 = vmatpush.msra.mxu0 %v398
        %v400 = vand.u32 %v187, 4294901760
        %v401 = vsub.f32 %v187, %v400
        %v402 = vand.u32 %v401, 4294901760
        %v403 = vsub.f32 %v401, %v402
        %v404 = vand.u32 %v403, 4294901760
        %405 = vmatpush.msra.mxu0 %v404
        %v406 = vand.u32 %v186, 4294901760
        %v407 = vsub.f32 %v186, %v406
        %v408 = vand.u32 %v407, 4294901760
        %v409 = vsub.f32 %v407, %v408
        %v410 = vand.u32 %v409, 4294901760
        %411 = vmatpush.msra.mxu0 %v410
        %v412 = vand.u32 %v185, 4294901760
        %v413 = vsub.f32 %v185, %v412
        %v414 = vand.u32 %v413, 4294901760
        %v415 = vsub.f32 %v413, %v414
        %v416 = vand.u32 %v415, 4294901760
        %417 = vmatpush.msra.mxu0 %v416
        %v418 = vand.u32 %v179, 4294901760
        %419 = vmatmul.f32.gmra.mxu0 %v418
        %v420 = vpop.f32.mrf.mxu0
        %v421 = vadd.f32 %v320, %v420
        %422 = vdwg.mxu0
        %v423 = vand.u32 %v200, 4294901760
        %v424 = vsub.f32 %v200, %v423
        %425 = vmatpush.msra.mxu0 %v424
        %v426 = vand.u32 %v199, 4294901760
        %v427 = vsub.f32 %v199, %v426
        %428 = vmatpush.msra.mxu0 %v427
        %v429 = vand.u32 %v198, 4294901760
        %v430 = vsub.f32 %v198, %v429
        %431 = vmatpush.msra.mxu0 %v430
        %v432 = vand.u32 %v197, 4294901760
        %v433 = vsub.f32 %v197, %v432
        %434 = vmatpush.msra.mxu0 %v433
        %v435 = vand.u32 %v196, 4294901760
        %v436 = vsub.f32 %v196, %v435
        %437 = vmatpush.msra.mxu0 %v436
        %v438 = vand.u32 %v195, 4294901760
        %v439 = vsub.f32 %v195, %v438
        %440 = vmatpush.msra.mxu0 %v439
        %v441 = vand.u32 %v194, 4294901760
        %v442 = vsub.f32 %v194, %v441
        %443 = vmatpush.msra.mxu0 %v442
        %v444 = vand.u32 %v193, 4294901760
        %v445 = vsub.f32 %v193, %v444
        %446 = vmatpush.msra.mxu0 %v445
        %v447 = vand.u32 %v192, 4294901760
        %v448 = vsub.f32 %v192, %v447
        %449 = vmatpush.msra.mxu0 %v448
        %v450 = vand.u32 %v191, 4294901760
        %v451 = vsub.f32 %v191, %v450
        %452 = vmatpush.msra.mxu0 %v451
        %v453 = vand.u32 %v190, 4294901760
        %v454 = vsub.f32 %v190, %v453
        %455 = vmatpush.msra.mxu0 %v454
        %v456 = vand.u32 %v189, 4294901760
        %v457 = vsub.f32 %v189, %v456
        %458 = vmatpush.msra.mxu0 %v457
        %v459 = vand.u32 %v188, 4294901760
        %v460 = vsub.f32 %v188, %v459
        %461 = vmatpush.msra.mxu0 %v460
        %v462 = vand.u32 %v187, 4294901760
        %v463 = vsub.f32 %v187, %v462
        %464 = vmatpush.msra.mxu0 %v463
        %v465 = vand.u32 %v186, 4294901760
        %v466 = vsub.f32 %v186, %v465
        %467 = vmatpush.msra.mxu0 %v466
        %v468 = vand.u32 %v185, 4294901760
        %v469 = vsub.f32 %v185, %v468
        %470 = vmatpush.msra.mxu0 %v469
        %v471 = vand.u32 %v179, 4294901760
        %v472 = vsub.f32 %v179, %v471
        %473 = vmatmul.f32.gmra.mxu0 %v472
        %v474 = vpop.f32.mrf.mxu0
        %v475 = vadd.f32 %v421, %v474
        %476 = vdwg.mxu0
        %v477 = vand.u32 %v200, 4294901760
        %478 = vmatpush.msra.mxu0 %v477
        %v479 = vand.u32 %v199, 4294901760
        %480 = vmatpush.msra.mxu0 %v479
        %v481 = vand.u32 %v198, 4294901760
        %482 = vmatpush.msra.mxu0 %v481
        %v483 = vand.u32 %v197, 4294901760
        %484 = vmatpush.msra.mxu0 %v483
        %v485 = vand.u32 %v196, 4294901760
        %486 = vmatpush.msra.mxu0 %v485
        %v487 = vand.u32 %v195, 4294901760
        %488 = vmatpush.msra.mxu0 %v487
        %v489 = vand.u32 %v194, 4294901760
        %490 = vmatpush.msra.mxu0 %v489
        %v491 = vand.u32 %v193, 4294901760
        %492 = vmatpush.msra.mxu0 %v491
        %v493 = vand.u32 %v192, 4294901760
        %494 = vmatpush.msra.mxu0 %v493
        %v495 = vand.u32 %v191, 4294901760
        %496 = vmatpush.msra.mxu0 %v495
        %v497 = vand.u32 %v190, 4294901760
        %498 = vmatpush.msra.mxu0 %v497
        %v499 = vand.u32 %v189, 4294901760
        %500 = vmatpush.msra.mxu0 %v499
        %v501 = vand.u32 %v188, 4294901760
        %502 = vmatpush.msra.mxu0 %v501
        %v503 = vand.u32 %v187, 4294901760
        %504 = vmatpush.msra.mxu0 %v503
        %v505 = vand.u32 %v186, 4294901760
        %506 = vmatpush.msra.mxu0 %v505
        %v507 = vand.u32 %v185, 4294901760
        %508 = vmatpush.msra.mxu0 %v507
        %v509 = vand.u32 %v179, 4294901760
        %v510 = vsub.f32 %v179, %v509
        %v511 = vand.u32 %v510, 4294901760
        %512 = vmatmul.f32.gmra.mxu0 %v511
        %v513 = vpop.f32.mrf.mxu0
        %v514 = vadd.f32 %v475, %v513
        %515 = vdwg.mxu0
        %v516 = vand.u32 %v200, 4294901760
        %v517 = vsub.f32 %v200, %v516
        %v518 = vand.u32 %v517, 4294901760
        %519 = vmatpush.msra.mxu0 %v518
        %v520 = vand.u32 %v199, 4294901760
        %v521 = vsub.f32 %v199, %v520
        %v522 = vand.u32 %v521, 4294901760
        %523 = vmatpush.msra.mxu0 %v522
        %v524 = vand.u32 %v198, 4294901760
        %v525 = vsub.f32 %v198, %v524
        %v526 = vand.u32 %v525, 4294901760
        %527 = vmatpush.msra.mxu0 %v526
        %v528 = vand.u32 %v197, 4294901760
        %v529 = vsub.f32 %v197, %v528
        %v530 = vand.u32 %v529, 4294901760
        %531 = vmatpush.msra.mxu0 %v530
        %v532 = vand.u32 %v196, 4294901760
        %v533 = vsub.f32 %v196, %v532
        %v534 = vand.u32 %v533, 4294901760
        %535 = vmatpush.msra.mxu0 %v534
        %v536 = vand.u32 %v195, 4294901760
        %v537 = vsub.f32 %v195, %v536
        %v538 = vand.u32 %v537, 4294901760
        %539 = vmatpush.msra.mxu0 %v538
        %v540 = vand.u32 %v194, 4294901760
        %v541 = vsub.f32 %v194, %v540
        %v542 = vand.u32 %v541, 4294901760
        %543 = vmatpush.msra.mxu0 %v542
        %v544 = vand.u32 %v193, 4294901760
        %v545 = vsub.f32 %v193, %v544
        %v546 = vand.u32 %v545, 4294901760
        %547 = vmatpush.msra.mxu0 %v546
        %v548 = vand.u32 %v192, 4294901760
        %v549 = vsub.f32 %v192, %v548
        %v550 = vand.u32 %v549, 4294901760
        %551 = vmatpush.msra.mxu0 %v550
        %v552 = vand.u32 %v191, 4294901760
        %v553 = vsub.f32 %v191, %v552
        %v554 = vand.u32 %v553, 4294901760
        %555 = vmatpush.msra.mxu0 %v554
        %v556 = vand.u32 %v190, 4294901760
        %v557 = vsub.f32 %v190, %v556
        %v558 = vand.u32 %v557, 4294901760
        %559 = vmatpush.msra.mxu0 %v558
        %v560 = vand.u32 %v189, 4294901760
        %v561 = vsub.f32 %v189, %v560
        %v562 = vand.u32 %v561, 4294901760
        %563 = vmatpush.msra.mxu0 %v562
        %v564 = vand.u32 %v188, 4294901760
        %v565 = vsub.f32 %v188, %v564
        %v566 = vand.u32 %v565, 4294901760
        %567 = vmatpush.msra.mxu0 %v566
        %v568 = vand.u32 %v187, 4294901760
        %v569 = vsub.f32 %v187, %v568
        %v570 = vand.u32 %v569, 4294901760
        %571 = vmatpush.msra.mxu0 %v570
        %v572 = vand.u32 %v186, 4294901760
        %v573 = vsub.f32 %v186, %v572
        %v574 = vand.u32 %v573, 4294901760
        %575 = vmatpush.msra.mxu0 %v574
        %v576 = vand.u32 %v185, 4294901760
        %v577 = vsub.f32 %v185, %v576
        %v578 = vand.u32 %v577, 4294901760
        %579 = vmatpush.msra.mxu0 %v578
        %v580 = vand.u32 %v179, 4294901760
        %581 = vmatmul.f32.gmra.mxu0 %v580
        %v582 = vpop.f32.mrf.mxu0
        %v583 = vadd.f32 %v514, %v582
        %584 = vdwg.mxu0
        %v585 = vand.u32 %v200, 4294901760
        %586 = vmatpush.msra.mxu0 %v585
        %v587 = vand.u32 %v199, 4294901760
        %588 = vmatpush.msra.mxu0 %v587
        %v589 = vand.u32 %v198, 4294901760
        %590 = vmatpush.msra.mxu0 %v589
        %v591 = vand.u32 %v197, 4294901760
        %592 = vmatpush.msra.mxu0 %v591
        %v593 = vand.u32 %v196, 4294901760
        %594 = vmatpush.msra.mxu0 %v593
        %v595 = vand.u32 %v195, 4294901760
        %596 = vmatpush.msra.mxu0 %v595
        %v597 = vand.u32 %v194, 4294901760
        %598 = vmatpush.msra.mxu0 %v597
        %v599 = vand.u32 %v193, 4294901760
        %600 = vmatpush.msra.mxu0 %v599
        %v601 = vand.u32 %v192, 4294901760
        %602 = vmatpush.msra.mxu0 %v601
        %v603 = vand.u32 %v191, 4294901760
        %604 = vmatpush.msra.mxu0 %v603
        %v605 = vand.u32 %v190, 4294901760
        %606 = vmatpush.msra.mxu0 %v605
        %v607 = vand.u32 %v189, 4294901760
        %608 = vmatpush.msra.mxu0 %v607
        %v609 = vand.u32 %v188, 4294901760
        %610 = vmatpush.msra.mxu0 %v609
        %v611 = vand.u32 %v187, 4294901760
        %612 = vmatpush.msra.mxu0 %v611
        %v613 = vand.u32 %v186, 4294901760
        %614 = vmatpush.msra.mxu0 %v613
        %v615 = vand.u32 %v185, 4294901760
        %616 = vmatpush.msra.mxu0 %v615
        %v617 = vand.u32 %v179, 4294901760
        %618 = vmatmul.f32.gmra.mxu0 %v617
        %v619 = vpop.f32.mrf.mxu0
        %v620 = vadd.f32 %v583, %v619
        %621 = vdwg.mxu0
        %v622 = vand.u32 %v216, 4294901760
        %623 = vmatpush.msra.mxu0 %v622
        %v624 = vand.u32 %v215, 4294901760
        %625 = vmatpush.msra.mxu0 %v624
        %v626 = vand.u32 %v214, 4294901760
        %627 = vmatpush.msra.mxu0 %v626
        %v628 = vand.u32 %v213, 4294901760
        %629 = vmatpush.msra.mxu0 %v628
        %v630 = vand.u32 %v212, 4294901760
        %631 = vmatpush.msra.mxu0 %v630
        %v632 = vand.u32 %v211, 4294901760
        %633 = vmatpush.msra.mxu0 %v632
        %v634 = vand.u32 %v210, 4294901760
        %635 = vmatpush.msra.mxu0 %v634
        %v636 = vand.u32 %v209, 4294901760
        %637 = vmatpush.msra.mxu0 %v636
        %v638 = vand.u32 %v208, 4294901760
        %639 = vmatpush.msra.mxu0 %v638
        %v640 = vand.u32 %v207, 4294901760
        %641 = vmatpush.msra.mxu0 %v640
        %v642 = vand.u32 %v206, 4294901760
        %643 = vmatpush.msra.mxu0 %v642
        %v644 = vand.u32 %v205, 4294901760
        %645 = vmatpush.msra.mxu0 %v644
        %v646 = vand.u32 %v204, 4294901760
        %647 = vmatpush.msra.mxu0 %v646
        %v648 = vand.u32 %v203, 4294901760
        %649 = vmatpush.msra.mxu0 %v648
        %v650 = vand.u32 %v202, 4294901760
        %651 = vmatpush.msra.mxu0 %v650
        %v652 = vand.u32 %v201, 4294901760
        %653 = vmatpush.msra.mxu0 %v652
        %v654 = vand.u32 %v180, 4294901760
        %v655 = vsub.f32 %v180, %v654
        %v656 = vand.u32 %v655, 4294901760
        %v657 = vsub.f32 %v655, %v656
        %v658 = vand.u32 %v657, 4294901760
        %659 = vmatmul.f32.gmra.mxu0 %v658
        %v660 = vpop.f32.mrf.mxu0
        %v661 = vadd.f32 %v620, %v660
        %662 = vdwg.mxu0
        %v663 = vand.u32 %v216, 4294901760
        %v664 = vsub.f32 %v216, %v663
        %v665 = vand.u32 %v664, 4294901760
        %v666 = vsub.f32 %v664, %v665
        %v667 = vand.u32 %v666, 4294901760
        %668 = vmatpush.msra.mxu0 %v667
        %v669 = vand.u32 %v215, 4294901760
        %v670 = vsub.f32 %v215, %v669
        %v671 = vand.u32 %v670, 4294901760
        %v672 = vsub.f32 %v670, %v671
        %v673 = vand.u32 %v672, 4294901760
        %674 = vmatpush.msra.mxu0 %v673
        %v675 = vand.u32 %v214, 4294901760
        %v676 = vsub.f32 %v214, %v675
        %v677 = vand.u32 %v676, 4294901760
        %v678 = vsub.f32 %v676, %v677
        %v679 = vand.u32 %v678, 4294901760
        %680 = vmatpush.msra.mxu0 %v679
        %v681 = vand.u32 %v213, 4294901760
        %v682 = vsub.f32 %v213, %v681
        %v683 = vand.u32 %v682, 4294901760
        %v684 = vsub.f32 %v682, %v683
        %v685 = vand.u32 %v684, 4294901760
        %686 = vmatpush.msra.mxu0 %v685
        %v687 = vand.u32 %v212, 4294901760
        %v688 = vsub.f32 %v212, %v687
        %v689 = vand.u32 %v688, 4294901760
        %v690 = vsub.f32 %v688, %v689
        %v691 = vand.u32 %v690, 4294901760
        %692 = vmatpush.msra.mxu0 %v691
        %v693 = vand.u32 %v211, 4294901760
        %v694 = vsub.f32 %v211, %v693
        %v695 = vand.u32 %v694, 4294901760
        %v696 = vsub.f32 %v694, %v695
        %v697 = vand.u32 %v696, 4294901760
        %698 = vmatpush.msra.mxu0 %v697
        %v699 = vand.u32 %v210, 4294901760
        %v700 = vsub.f32 %v210, %v699
        %v701 = vand.u32 %v700, 4294901760
        %v702 = vsub.f32 %v700, %v701
        %v703 = vand.u32 %v702, 4294901760
        %704 = vmatpush.msra.mxu0 %v703
        %v705 = vand.u32 %v209, 4294901760
        %v706 = vsub.f32 %v209, %v705
        %v707 = vand.u32 %v706, 4294901760
        %v708 = vsub.f32 %v706, %v707
        %v709 = vand.u32 %v708, 4294901760
        %710 = vmatpush.msra.mxu0 %v709
        %v711 = vand.u32 %v208, 4294901760
        %v712 = vsub.f32 %v208, %v711
        %v713 = vand.u32 %v712, 4294901760
        %v714 = vsub.f32 %v712, %v713
        %v715 = vand.u32 %v714, 4294901760
        %716 = vmatpush.msra.mxu0 %v715
        %v717 = vand.u32 %v207, 4294901760
        %v718 = vsub.f32 %v207, %v717
        %v719 = vand.u32 %v718, 4294901760
        %v720 = vsub.f32 %v718, %v719
        %v721 = vand.u32 %v720, 4294901760
        %722 = vmatpush.msra.mxu0 %v721
        %v723 = vand.u32 %v206, 4294901760
        %v724 = vsub.f32 %v206, %v723
        %v725 = vand.u32 %v724, 4294901760
        %v726 = vsub.f32 %v724, %v725
        %v727 = vand.u32 %v726, 4294901760
        %728 = vmatpush.msra.mxu0 %v727
        %v729 = vand.u32 %v205, 4294901760
        %v730 = vsub.f32 %v205, %v729
        %v731 = vand.u32 %v730, 4294901760
        %v732 = vsub.f32 %v730, %v731
        %v733 = vand.u32 %v732, 4294901760
        %734 = vmatpush.msra.mxu0 %v733
        %v735 = vand.u32 %v204, 4294901760
        %v736 = vsub.f32 %v204, %v735
        %v737 = vand.u32 %v736, 4294901760
        %v738 = vsub.f32 %v736, %v737
        %v739 = vand.u32 %v738, 4294901760
        %740 = vmatpush.msra.mxu0 %v739
        %v741 = vand.u32 %v203, 4294901760
        %v742 = vsub.f32 %v203, %v741
        %v743 = vand.u32 %v742, 4294901760
        %v744 = vsub.f32 %v742, %v743
        %v745 = vand.u32 %v744, 4294901760
        %746 = vmatpush.msra.mxu0 %v745
        %v747 = vand.u32 %v202, 4294901760
        %v748 = vsub.f32 %v202, %v747
        %v749 = vand.u32 %v748, 4294901760
        %v750 = vsub.f32 %v748, %v749
        %v751 = vand.u32 %v750, 4294901760
        %752 = vmatpush.msra.mxu0 %v751
        %v753 = vand.u32 %v201, 4294901760
        %v754 = vsub.f32 %v201, %v753
        %v755 = vand.u32 %v754, 4294901760
        %v756 = vsub.f32 %v754, %v755
        %v757 = vand.u32 %v756, 4294901760
        %758 = vmatpush.msra.mxu0 %v757
        %v759 = vand.u32 %v180, 4294901760
        %760 = vmatmul.f32.gmra.mxu0 %v759
        %v761 = vpop.f32.mrf.mxu0
        %v762 = vadd.f32 %v661, %v761
        %763 = vdwg.mxu0
        %v764 = vand.u32 %v216, 4294901760
        %v765 = vsub.f32 %v216, %v764
        %766 = vmatpush.msra.mxu0 %v765
        %v767 = vand.u32 %v215, 4294901760
        %v768 = vsub.f32 %v215, %v767
        %769 = vmatpush.msra.mxu0 %v768
        %v770 = vand.u32 %v214, 4294901760
        %v771 = vsub.f32 %v214, %v770
        %772 = vmatpush.msra.mxu0 %v771
        %v773 = vand.u32 %v213, 4294901760
        %v774 = vsub.f32 %v213, %v773
        %775 = vmatpush.msra.mxu0 %v774
        %v776 = vand.u32 %v212, 4294901760
        %v777 = vsub.f32 %v212, %v776
        %778 = vmatpush.msra.mxu0 %v777
        %v779 = vand.u32 %v211, 4294901760
        %v780 = vsub.f32 %v211, %v779
        %781 = vmatpush.msra.mxu0 %v780
        %v782 = vand.u32 %v210, 4294901760
        %v783 = vsub.f32 %v210, %v782
        %784 = vmatpush.msra.mxu0 %v783
        %v785 = vand.u32 %v209, 4294901760
        %v786 = vsub.f32 %v209, %v785
        %787 = vmatpush.msra.mxu0 %v786
        %v788 = vand.u32 %v208, 4294901760
        %v789 = vsub.f32 %v208, %v788
        %790 = vmatpush.msra.mxu0 %v789
        %v791 = vand.u32 %v207, 4294901760
        %v792 = vsub.f32 %v207, %v791
        %793 = vmatpush.msra.mxu0 %v792
        %v794 = vand.u32 %v206, 4294901760
        %v795 = vsub.f32 %v206, %v794
        %796 = vmatpush.msra.mxu0 %v795
        %v797 = vand.u32 %v205, 4294901760
        %v798 = vsub.f32 %v205, %v797
        %799 = vmatpush.msra.mxu0 %v798
        %v800 = vand.u32 %v204, 4294901760
        %v801 = vsub.f32 %v204, %v800
        %802 = vmatpush.msra.mxu0 %v801
        %v803 = vand.u32 %v203, 4294901760
        %v804 = vsub.f32 %v203, %v803
        %805 = vmatpush.msra.mxu0 %v804
        %v806 = vand.u32 %v202, 4294901760
        %v807 = vsub.f32 %v202, %v806
        %808 = vmatpush.msra.mxu0 %v807
        %v809 = vand.u32 %v201, 4294901760
        %v810 = vsub.f32 %v201, %v809
        %811 = vmatpush.msra.mxu0 %v810
        %v812 = vand.u32 %v180, 4294901760
        %v813 = vsub.f32 %v180, %v812
        %814 = vmatmul.f32.gmra.mxu0 %v813
        %v815 = vpop.f32.mrf.mxu0
        %v816 = vadd.f32 %v762, %v815
        %817 = vdwg.mxu0
        %v818 = vand.u32 %v216, 4294901760
        %819 = vmatpush.msra.mxu0 %v818
        %v820 = vand.u32 %v215, 4294901760
        %821 = vmatpush.msra.mxu0 %v820
        %v822 = vand.u32 %v214, 4294901760
        %823 = vmatpush.msra.mxu0 %v822
        %v824 = vand.u32 %v213, 4294901760
        %825 = vmatpush.msra.mxu0 %v824
        %v826 = vand.u32 %v212, 4294901760
        %827 = vmatpush.msra.mxu0 %v826
        %v828 = vand.u32 %v211, 4294901760
        %829 = vmatpush.msra.mxu0 %v828
        %v830 = vand.u32 %v210, 4294901760
        %831 = vmatpush.msra.mxu0 %v830
        %v832 = vand.u32 %v209, 4294901760
        %833 = vmatpush.msra.mxu0 %v832
        %v834 = vand.u32 %v208, 4294901760
        %835 = vmatpush.msra.mxu0 %v834
        %v836 = vand.u32 %v207, 4294901760
        %837 = vmatpush.msra.mxu0 %v836
        %v838 = vand.u32 %v206, 4294901760
        %839 = vmatpush.msra.mxu0 %v838
        %v840 = vand.u32 %v205, 4294901760
        %841 = vmatpush.msra.mxu0 %v840
        %v842 = vand.u32 %v204, 4294901760
        %843 = vmatpush.msra.mxu0 %v842
        %v844 = vand.u32 %v203, 4294901760
        %845 = vmatpush.msra.mxu0 %v844
        %v846 = vand.u32 %v202, 4294901760
        %847 = vmatpush.msra.mxu0 %v846
        %v848 = vand.u32 %v201, 4294901760
        %849 = vmatpush.msra.mxu0 %v848
        %v850 = vand.u32 %v180, 4294901760
        %v851 = vsub.f32 %v180, %v850
        %v852 = vand.u32 %v851, 4294901760
        %853 = vmatmul.f32.gmra.mxu0 %v852
        %v854 = vpop.f32.mrf.mxu0
        %v855 = vadd.f32 %v816, %v854
        %856 = vdwg.mxu0
        %v857 = vand.u32 %v216, 4294901760
        %v858 = vsub.f32 %v216, %v857
        %v859 = vand.u32 %v858, 4294901760
        %860 = vmatpush.msra.mxu0 %v859
        %v861 = vand.u32 %v215, 4294901760
        %v862 = vsub.f32 %v215, %v861
        %v863 = vand.u32 %v862, 4294901760
        %864 = vmatpush.msra.mxu0 %v863
        %v865 = vand.u32 %v214, 4294901760
        %v866 = vsub.f32 %v214, %v865
        %v867 = vand.u32 %v866, 4294901760
        %868 = vmatpush.msra.mxu0 %v867
        %v869 = vand.u32 %v213, 4294901760
        %v870 = vsub.f32 %v213, %v869
        %v871 = vand.u32 %v870, 4294901760
        %872 = vmatpush.msra.mxu0 %v871
        %v873 = vand.u32 %v212, 4294901760
        %v874 = vsub.f32 %v212, %v873
        %v875 = vand.u32 %v874, 4294901760
        %876 = vmatpush.msra.mxu0 %v875
        %v877 = vand.u32 %v211, 4294901760
        %v878 = vsub.f32 %v211, %v877
        %v879 = vand.u32 %v878, 4294901760
        %880 = vmatpush.msra.mxu0 %v879
        %v881 = vand.u32 %v210, 4294901760
        %v882 = vsub.f32 %v210, %v881
        %v883 = vand.u32 %v882, 4294901760
        %884 = vmatpush.msra.mxu0 %v883
        %v885 = vand.u32 %v209, 4294901760
        %v886 = vsub.f32 %v209, %v885
        %v887 = vand.u32 %v886, 4294901760
        %888 = vmatpush.msra.mxu0 %v887
        %v889 = vand.u32 %v208, 4294901760
        %v890 = vsub.f32 %v208, %v889
        %v891 = vand.u32 %v890, 4294901760
        %892 = vmatpush.msra.mxu0 %v891
        %v893 = vand.u32 %v207, 4294901760
        %v894 = vsub.f32 %v207, %v893
        %v895 = vand.u32 %v894, 4294901760
        %896 = vmatpush.msra.mxu0 %v895
        %v897 = vand.u32 %v206, 4294901760
        %v898 = vsub.f32 %v206, %v897
        %v899 = vand.u32 %v898, 4294901760
        %900 = vmatpush.msra.mxu0 %v899
        %v901 = vand.u32 %v205, 4294901760
        %v902 = vsub.f32 %v205, %v901
        %v903 = vand.u32 %v902, 4294901760
        %904 = vmatpush.msra.mxu0 %v903
        %v905 = vand.u32 %v204, 4294901760
        %v906 = vsub.f32 %v204, %v905
        %v907 = vand.u32 %v906, 4294901760
        %908 = vmatpush.msra.mxu0 %v907
        %v909 = vand.u32 %v203, 4294901760
        %v910 = vsub.f32 %v203, %v909
        %v911 = vand.u32 %v910, 4294901760
        %912 = vmatpush.msra.mxu0 %v911
        %v913 = vand.u32 %v202, 4294901760
        %v914 = vsub.f32 %v202, %v913
        %v915 = vand.u32 %v914, 4294901760
        %916 = vmatpush.msra.mxu0 %v915
        %v917 = vand.u32 %v201, 4294901760
        %v918 = vsub.f32 %v201, %v917
        %v919 = vand.u32 %v918, 4294901760
        %920 = vmatpush.msra.mxu0 %v919
        %v921 = vand.u32 %v180, 4294901760
        %922 = vmatmul.f32.gmra.mxu0 %v921
        %v923 = vpop.f32.mrf.mxu0
        %v924 = vadd.f32 %v855, %v923
        %925 = vdwg.mxu0
        %v926 = vand.u32 %v216, 4294901760
        %927 = vmatpush.msra.mxu0 %v926
        %v928 = vand.u32 %v215, 4294901760
        %929 = vmatpush.msra.mxu0 %v928
        %v930 = vand.u32 %v214, 4294901760
        %931 = vmatpush.msra.mxu0 %v930
        %v932 = vand.u32 %v213, 4294901760
        %933 = vmatpush.msra.mxu0 %v932
        %v934 = vand.u32 %v212, 4294901760
        %935 = vmatpush.msra.mxu0 %v934
        %v936 = vand.u32 %v211, 4294901760
        %937 = vmatpush.msra.mxu0 %v936
        %v938 = vand.u32 %v210, 4294901760
        %939 = vmatpush.msra.mxu0 %v938
        %v940 = vand.u32 %v209, 4294901760
        %941 = vmatpush.msra.mxu0 %v940
        %v942 = vand.u32 %v208, 4294901760
        %943 = vmatpush.msra.mxu0 %v942
        %v944 = vand.u32 %v207, 4294901760
        %945 = vmatpush.msra.mxu0 %v944
        %v946 = vand.u32 %v206, 4294901760
        %947 = vmatpush.msra.mxu0 %v946
        %v948 = vand.u32 %v205, 4294901760
        %949 = vmatpush.msra.mxu0 %v948
        %v950 = vand.u32 %v204, 4294901760
        %951 = vmatpush.msra.mxu0 %v950
        %v952 = vand.u32 %v203, 4294901760
        %953 = vmatpush.msra.mxu0 %v952
        %v954 = vand.u32 %v202, 4294901760
        %955 = vmatpush.msra.mxu0 %v954
        %v956 = vand.u32 %v201, 4294901760
        %957 = vmatpush.msra.mxu0 %v956
        %v958 = vand.u32 %v180, 4294901760
        %959 = vmatmul.f32.gmra.mxu0 %v958
        %v960 = vpop.f32.mrf.mxu0
        %v961 = vadd.f32 %v924, %v960
        %962 = vdwg.mxu0
        %v963 = vand.u32 %v232, 4294901760
        %964 = vmatpush.msra.mxu0 %v963
        %v965 = vand.u32 %v231, 4294901760
        %966 = vmatpush.msra.mxu0 %v965
        %v967 = vand.u32 %v230, 4294901760
        %968 = vmatpush.msra.mxu0 %v967
        %v969 = vand.u32 %v229, 4294901760
        %970 = vmatpush.msra.mxu0 %v969
        %v971 = vand.u32 %v228, 4294901760
        %972 = vmatpush.msra.mxu0 %v971
        %v973 = vand.u32 %v227, 4294901760
        %974 = vmatpush.msra.mxu0 %v973
        %v975 = vand.u32 %v226, 4294901760
        %976 = vmatpush.msra.mxu0 %v975
        %v977 = vand.u32 %v225, 4294901760
        %978 = vmatpush.msra.mxu0 %v977
        %v979 = vand.u32 %v224, 4294901760
        %980 = vmatpush.msra.mxu0 %v979
        %v981 = vand.u32 %v223, 4294901760
        %982 = vmatpush.msra.mxu0 %v981
        %v983 = vand.u32 %v222, 4294901760
        %984 = vmatpush.msra.mxu0 %v983
        %v985 = vand.u32 %v221, 4294901760
        %986 = vmatpush.msra.mxu0 %v985
        %v987 = vand.u32 %v220, 4294901760
        %988 = vmatpush.msra.mxu0 %v987
        %v989 = vand.u32 %v219, 4294901760
        %990 = vmatpush.msra.mxu0 %v989
        %v991 = vand.u32 %v218, 4294901760
        %992 = vmatpush.msra.mxu0 %v991
        %v993 = vand.u32 %v217, 4294901760
        %994 = vmatpush.msra.mxu0 %v993
        %v995 = vand.u32 %v181, 4294901760
        %v996 = vsub.f32 %v181, %v995
        %v997 = vand.u32 %v996, 4294901760
        %v998 = vsub.f32 %v996, %v997
        %v999 = vand.u32 %v998, 4294901760
        %1000 = vmatmul.f32.gmra.mxu0 %v999
        %v1001 = vpop.f32.mrf.mxu0
        %v1002 = vadd.f32 %v961, %v1001
        %1003 = vdwg.mxu0
        %v1004 = vand.u32 %v232, 4294901760
        %v1005 = vsub.f32 %v232, %v1004
        %v1006 = vand.u32 %v1005, 4294901760
        %v1007 = vsub.f32 %v1005, %v1006
        %v1008 = vand.u32 %v1007, 4294901760
        %1009 = vmatpush.msra.mxu0 %v1008
        %v1010 = vand.u32 %v231, 4294901760
        %v1011 = vsub.f32 %v231, %v1010
        %v1012 = vand.u32 %v1011, 4294901760
        %v1013 = vsub.f32 %v1011, %v1012
        %v1014 = vand.u32 %v1013, 4294901760
        %1015 = vmatpush.msra.mxu0 %v1014
        %v1016 = vand.u32 %v230, 4294901760
        %v1017 = vsub.f32 %v230, %v1016
        %v1018 = vand.u32 %v1017, 4294901760
        %v1019 = vsub.f32 %v1017, %v1018
        %v1020 = vand.u32 %v1019, 4294901760
        %1021 = vmatpush.msra.mxu0 %v1020
        %v1022 = vand.u32 %v229, 4294901760
        %v1023 = vsub.f32 %v229, %v1022
        %v1024 = vand.u32 %v1023, 4294901760
        %v1025 = vsub.f32 %v1023, %v1024
        %v1026 = vand.u32 %v1025, 4294901760
        %1027 = vmatpush.msra.mxu0 %v1026
        %v1028 = vand.u32 %v228, 4294901760
        %v1029 = vsub.f32 %v228, %v1028
        %v1030 = vand.u32 %v1029, 4294901760
        %v1031 = vsub.f32 %v1029, %v1030
        %v1032 = vand.u32 %v1031, 4294901760
        %1033 = vmatpush.msra.mxu0 %v1032
        %v1034 = vand.u32 %v227, 4294901760
        %v1035 = vsub.f32 %v227, %v1034
        %v1036 = vand.u32 %v1035, 4294901760
        %v1037 = vsub.f32 %v1035, %v1036
        %v1038 = vand.u32 %v1037, 4294901760
        %1039 = vmatpush.msra.mxu0 %v1038
        %v1040 = vand.u32 %v226, 4294901760
        %v1041 = vsub.f32 %v226, %v1040
        %v1042 = vand.u32 %v1041, 4294901760
        %v1043 = vsub.f32 %v1041, %v1042
        %v1044 = vand.u32 %v1043, 4294901760
        %1045 = vmatpush.msra.mxu0 %v1044
        %v1046 = vand.u32 %v225, 4294901760
        %v1047 = vsub.f32 %v225, %v1046
        %v1048 = vand.u32 %v1047, 4294901760
        %v1049 = vsub.f32 %v1047, %v1048
        %v1050 = vand.u32 %v1049, 4294901760
        %1051 = vmatpush.msra.mxu0 %v1050
        %v1052 = vand.u32 %v224, 4294901760
        %v1053 = vsub.f32 %v224, %v1052
        %v1054 = vand.u32 %v1053, 4294901760
        %v1055 = vsub.f32 %v1053, %v1054
        %v1056 = vand.u32 %v1055, 4294901760
        %1057 = vmatpush.msra.mxu0 %v1056
        %v1058 = vand.u32 %v223, 4294901760
        %v1059 = vsub.f32 %v223, %v1058
        %v1060 = vand.u32 %v1059, 4294901760
        %v1061 = vsub.f32 %v1059, %v1060
        %v1062 = vand.u32 %v1061, 4294901760
        %1063 = vmatpush.msra.mxu0 %v1062
        %v1064 = vand.u32 %v222, 4294901760
        %v1065 = vsub.f32 %v222, %v1064
        %v1066 = vand.u32 %v1065, 4294901760
        %v1067 = vsub.f32 %v1065, %v1066
        %v1068 = vand.u32 %v1067, 4294901760
        %1069 = vmatpush.msra.mxu0 %v1068
        %v1070 = vand.u32 %v221, 4294901760
        %v1071 = vsub.f32 %v221, %v1070
        %v1072 = vand.u32 %v1071, 4294901760
        %v1073 = vsub.f32 %v1071, %v1072
        %v1074 = vand.u32 %v1073, 4294901760
        %1075 = vmatpush.msra.mxu0 %v1074
        %v1076 = vand.u32 %v220, 4294901760
        %v1077 = vsub.f32 %v220, %v1076
        %v1078 = vand.u32 %v1077, 4294901760
        %v1079 = vsub.f32 %v1077, %v1078
        %v1080 = vand.u32 %v1079, 4294901760
        %1081 = vmatpush.msra.mxu0 %v1080
        %v1082 = vand.u32 %v219, 4294901760
        %v1083 = vsub.f32 %v219, %v1082
        %v1084 = vand.u32 %v1083, 4294901760
        %v1085 = vsub.f32 %v1083, %v1084
        %v1086 = vand.u32 %v1085, 4294901760
        %1087 = vmatpush.msra.mxu0 %v1086
        %v1088 = vand.u32 %v218, 4294901760
        %v1089 = vsub.f32 %v218, %v1088
        %v1090 = vand.u32 %v1089, 4294901760
        %v1091 = vsub.f32 %v1089, %v1090
        %v1092 = vand.u32 %v1091, 4294901760
        %1093 = vmatpush.msra.mxu0 %v1092
        %v1094 = vand.u32 %v217, 4294901760
        %v1095 = vsub.f32 %v217, %v1094
        %v1096 = vand.u32 %v1095, 4294901760
        %v1097 = vsub.f32 %v1095, %v1096
        %v1098 = vand.u32 %v1097, 4294901760
        %1099 = vmatpush.msra.mxu0 %v1098
        %v1100 = vand.u32 %v181, 4294901760
        %1101 = vmatmul.f32.gmra.mxu0 %v1100
        %v1102 = vpop.f32.mrf.mxu0
        %v1103 = vadd.f32 %v1002, %v1102
        %1104 = vdwg.mxu0
        %v1105 = vand.u32 %v232, 4294901760
        %v1106 = vsub.f32 %v232, %v1105
        %1107 = vmatpush.msra.mxu0 %v1106
        %v1108 = vand.u32 %v231, 4294901760
        %v1109 = vsub.f32 %v231, %v1108
        %1110 = vmatpush.msra.mxu0 %v1109
        %v1111 = vand.u32 %v230, 4294901760
        %v1112 = vsub.f32 %v230, %v1111
        %1113 = vmatpush.msra.mxu0 %v1112
        %v1114 = vand.u32 %v229, 4294901760
        %v1115 = vsub.f32 %v229, %v1114
        %1116 = vmatpush.msra.mxu0 %v1115
        %v1117 = vand.u32 %v228, 4294901760
        %v1118 = vsub.f32 %v228, %v1117
        %1119 = vmatpush.msra.mxu0 %v1118
        %v1120 = vand.u32 %v227, 4294901760
        %v1121 = vsub.f32 %v227, %v1120
        %1122 = vmatpush.msra.mxu0 %v1121
        %v1123 = vand.u32 %v226, 4294901760
        %v1124 = vsub.f32 %v226, %v1123
        %1125 = vmatpush.msra.mxu0 %v1124
        %v1126 = vand.u32 %v225, 4294901760
        %v1127 = vsub.f32 %v225, %v1126
        %1128 = vmatpush.msra.mxu0 %v1127
        %v1129 = vand.u32 %v224, 4294901760
        %v1130 = vsub.f32 %v224, %v1129
        %1131 = vmatpush.msra.mxu0 %v1130
        %v1132 = vand.u32 %v223, 4294901760
        %v1133 = vsub.f32 %v223, %v1132
        %1134 = vmatpush.msra.mxu0 %v1133
        %v1135 = vand.u32 %v222, 4294901760
        %v1136 = vsub.f32 %v222, %v1135
        %1137 = vmatpush.msra.mxu0 %v1136
        %v1138 = vand.u32 %v221, 4294901760
        %v1139 = vsub.f32 %v221, %v1138
        %1140 = vmatpush.msra.mxu0 %v1139
        %v1141 = vand.u32 %v220, 4294901760
        %v1142 = vsub.f32 %v220, %v1141
        %1143 = vmatpush.msra.mxu0 %v1142
        %v1144 = vand.u32 %v219, 4294901760
        %v1145 = vsub.f32 %v219, %v1144
        %1146 = vmatpush.msra.mxu0 %v1145
        %v1147 = vand.u32 %v218, 4294901760
        %v1148 = vsub.f32 %v218, %v1147
        %1149 = vmatpush.msra.mxu0 %v1148
        %v1150 = vand.u32 %v217, 4294901760
        %v1151 = vsub.f32 %v217, %v1150
        %1152 = vmatpush.msra.mxu0 %v1151
        %v1153 = vand.u32 %v181, 4294901760
        %v1154 = vsub.f32 %v181, %v1153
        %1155 = vmatmul.f32.gmra.mxu0 %v1154
        %v1156 = vpop.f32.mrf.mxu0
        %v1157 = vadd.f32 %v1103, %v1156
        %1158 = vdwg.mxu0
        %v1159 = vand.u32 %v232, 4294901760
        %1160 = vmatpush.msra.mxu0 %v1159
        %v1161 = vand.u32 %v231, 4294901760
        %1162 = vmatpush.msra.mxu0 %v1161
        %v1163 = vand.u32 %v230, 4294901760
        %1164 = vmatpush.msra.mxu0 %v1163
        %v1165 = vand.u32 %v229, 4294901760
        %1166 = vmatpush.msra.mxu0 %v1165
        %v1167 = vand.u32 %v228, 4294901760
        %1168 = vmatpush.msra.mxu0 %v1167
        %v1169 = vand.u32 %v227, 4294901760
        %1170 = vmatpush.msra.mxu0 %v1169
        %v1171 = vand.u32 %v226, 4294901760
        %1172 = vmatpush.msra.mxu0 %v1171
        %v1173 = vand.u32 %v225, 4294901760
        %1174 = vmatpush.msra.mxu0 %v1173
        %v1175 = vand.u32 %v224, 4294901760
        %1176 = vmatpush.msra.mxu0 %v1175
        %v1177 = vand.u32 %v223, 4294901760
        %1178 = vmatpush.msra.mxu0 %v1177
        %v1179 = vand.u32 %v222, 4294901760
        %1180 = vmatpush.msra.mxu0 %v1179
        %v1181 = vand.u32 %v221, 4294901760
        %1182 = vmatpush.msra.mxu0 %v1181
        %v1183 = vand.u32 %v220, 4294901760
        %1184 = vmatpush.msra.mxu0 %v1183
        %v1185 = vand.u32 %v219, 4294901760
        %1186 = vmatpush.msra.mxu0 %v1185
        %v1187 = vand.u32 %v218, 4294901760
        %1188 = vmatpush.msra.mxu0 %v1187
        %v1189 = vand.u32 %v217, 4294901760
        %1190 = vmatpush.msra.mxu0 %v1189
        %v1191 = vand.u32 %v181, 4294901760
        %v1192 = vsub.f32 %v181, %v1191
        %v1193 = vand.u32 %v1192, 4294901760
        %1194 = vmatmul.f32.gmra.mxu0 %v1193
        %v1195 = vpop.f32.mrf.mxu0
        %v1196 = vadd.f32 %v1157, %v1195
        %1197 = vdwg.mxu0
        %v1198 = vand.u32 %v232, 4294901760
        %v1199 = vsub.f32 %v232, %v1198
        %v1200 = vand.u32 %v1199, 4294901760
        %1201 = vmatpush.msra.mxu0 %v1200
        %v1202 = vand.u32 %v231, 4294901760
        %v1203 = vsub.f32 %v231, %v1202
        %v1204 = vand.u32 %v1203, 4294901760
        %1205 = vmatpush.msra.mxu0 %v1204
        %v1206 = vand.u32 %v230, 4294901760
        %v1207 = vsub.f32 %v230, %v1206
        %v1208 = vand.u32 %v1207, 4294901760
        %1209 = vmatpush.msra.mxu0 %v1208
        %v1210 = vand.u32 %v229, 4294901760
        %v1211 = vsub.f32 %v229, %v1210
        %v1212 = vand.u32 %v1211, 4294901760
        %1213 = vmatpush.msra.mxu0 %v1212
        %v1214 = vand.u32 %v228, 4294901760
        %v1215 = vsub.f32 %v228, %v1214
        %v1216 = vand.u32 %v1215, 4294901760
        %1217 = vmatpush.msra.mxu0 %v1216
        %v1218 = vand.u32 %v227, 4294901760
        %v1219 = vsub.f32 %v227, %v1218
        %v1220 = vand.u32 %v1219, 4294901760
        %1221 = vmatpush.msra.mxu0 %v1220
        %v1222 = vand.u32 %v226, 4294901760
        %v1223 = vsub.f32 %v226, %v1222
        %v1224 = vand.u32 %v1223, 4294901760
        %1225 = vmatpush.msra.mxu0 %v1224
        %v1226 = vand.u32 %v225, 4294901760
        %v1227 = vsub.f32 %v225, %v1226
        %v1228 = vand.u32 %v1227, 4294901760
        %1229 = vmatpush.msra.mxu0 %v1228
        %v1230 = vand.u32 %v224, 4294901760
        %v1231 = vsub.f32 %v224, %v1230
        %v1232 = vand.u32 %v1231, 4294901760
        %1233 = vmatpush.msra.mxu0 %v1232
        %v1234 = vand.u32 %v223, 4294901760
        %v1235 = vsub.f32 %v223, %v1234
        %v1236 = vand.u32 %v1235, 4294901760
        %1237 = vmatpush.msra.mxu0 %v1236
        %v1238 = vand.u32 %v222, 4294901760
        %v1239 = vsub.f32 %v222, %v1238
        %v1240 = vand.u32 %v1239, 4294901760
        %1241 = vmatpush.msra.mxu0 %v1240
        %v1242 = vand.u32 %v221, 4294901760
        %v1243 = vsub.f32 %v221, %v1242
        %v1244 = vand.u32 %v1243, 4294901760
        %1245 = vmatpush.msra.mxu0 %v1244
        %v1246 = vand.u32 %v220, 4294901760
        %v1247 = vsub.f32 %v220, %v1246
        %v1248 = vand.u32 %v1247, 4294901760
        %1249 = vmatpush.msra.mxu0 %v1248
        %v1250 = vand.u32 %v219, 4294901760
        %v1251 = vsub.f32 %v219, %v1250
        %v1252 = vand.u32 %v1251, 4294901760
        %1253 = vmatpush.msra.mxu0 %v1252
        %v1254 = vand.u32 %v218, 4294901760
        %v1255 = vsub.f32 %v218, %v1254
        %v1256 = vand.u32 %v1255, 4294901760
        %1257 = vmatpush.msra.mxu0 %v1256
        %v1258 = vand.u32 %v217, 4294901760
        %v1259 = vsub.f32 %v217, %v1258
        %v1260 = vand.u32 %v1259, 4294901760
        %1261 = vmatpush.msra.mxu0 %v1260
        %v1262 = vand.u32 %v181, 4294901760
        %1263 = vmatmul.f32.gmra.mxu0 %v1262
        %v1264 = vpop.f32.mrf.mxu0
        %v1265 = vadd.f32 %v1196, %v1264
        %1266 = vdwg.mxu0
        %v1267 = vand.u32 %v232, 4294901760
        %1268 = vmatpush.msra.mxu0 %v1267
        %v1269 = vand.u32 %v231, 4294901760
        %1270 = vmatpush.msra.mxu0 %v1269
        %v1271 = vand.u32 %v230, 4294901760
        %1272 = vmatpush.msra.mxu0 %v1271
        %v1273 = vand.u32 %v229, 4294901760
        %1274 = vmatpush.msra.mxu0 %v1273
        %v1275 = vand.u32 %v228, 4294901760
        %1276 = vmatpush.msra.mxu0 %v1275
        %v1277 = vand.u32 %v227, 4294901760
        %1278 = vmatpush.msra.mxu0 %v1277
        %v1279 = vand.u32 %v226, 4294901760
        %1280 = vmatpush.msra.mxu0 %v1279
        %v1281 = vand.u32 %v225, 4294901760
        %1282 = vmatpush.msra.mxu0 %v1281
        %v1283 = vand.u32 %v224, 4294901760
        %1284 = vmatpush.msra.mxu0 %v1283
        %v1285 = vand.u32 %v223, 4294901760
        %1286 = vmatpush.msra.mxu0 %v1285
        %v1287 = vand.u32 %v222, 4294901760
        %1288 = vmatpush.msra.mxu0 %v1287
        %v1289 = vand.u32 %v221, 4294901760
        %1290 = vmatpush.msra.mxu0 %v1289
        %v1291 = vand.u32 %v220, 4294901760
        %1292 = vmatpush.msra.mxu0 %v1291
        %v1293 = vand.u32 %v219, 4294901760
        %1294 = vmatpush.msra.mxu0 %v1293
        %v1295 = vand.u32 %v218, 4294901760
        %1296 = vmatpush.msra.mxu0 %v1295
        %v1297 = vand.u32 %v217, 4294901760
        %1298 = vmatpush.msra.mxu0 %v1297
        %v1299 = vand.u32 %v181, 4294901760
        %1300 = vmatmul.f32.gmra.mxu0 %v1299
        %v1301 = vpop.f32.mrf.mxu0
        %v1302 = vadd.f32 %v1265, %v1301
        %1303 = vdwg.mxu0
        %v1304 = vand.u32 %v248, 4294901760
        %1305 = vmatpush.msra.mxu0 %v1304
        %v1306 = vand.u32 %v247, 4294901760
        %1307 = vmatpush.msra.mxu0 %v1306
        %v1308 = vand.u32 %v246, 4294901760
        %1309 = vmatpush.msra.mxu0 %v1308
        %v1310 = vand.u32 %v245, 4294901760
        %1311 = vmatpush.msra.mxu0 %v1310
        %v1312 = vand.u32 %v244, 4294901760
        %1313 = vmatpush.msra.mxu0 %v1312
        %v1314 = vand.u32 %v243, 4294901760
        %1315 = vmatpush.msra.mxu0 %v1314
        %v1316 = vand.u32 %v242, 4294901760
        %1317 = vmatpush.msra.mxu0 %v1316
        %v1318 = vand.u32 %v241, 4294901760
        %1319 = vmatpush.msra.mxu0 %v1318
        %v1320 = vand.u32 %v240, 4294901760
        %1321 = vmatpush.msra.mxu0 %v1320
        %v1322 = vand.u32 %v239, 4294901760
        %1323 = vmatpush.msra.mxu0 %v1322
        %v1324 = vand.u32 %v238, 4294901760
        %1325 = vmatpush.msra.mxu0 %v1324
        %v1326 = vand.u32 %v237, 4294901760
        %1327 = vmatpush.msra.mxu0 %v1326
        %v1328 = vand.u32 %v236, 4294901760
        %1329 = vmatpush.msra.mxu0 %v1328
        %v1330 = vand.u32 %v235, 4294901760
        %1331 = vmatpush.msra.mxu0 %v1330
        %v1332 = vand.u32 %v234, 4294901760
        %1333 = vmatpush.msra.mxu0 %v1332
        %v1334 = vand.u32 %v233, 4294901760
        %1335 = vmatpush.msra.mxu0 %v1334
        %v1336 = vand.u32 %v182, 4294901760
        %v1337 = vsub.f32 %v182, %v1336
        %v1338 = vand.u32 %v1337, 4294901760
        %v1339 = vsub.f32 %v1337, %v1338
        %v1340 = vand.u32 %v1339, 4294901760
        %1341 = vmatmul.f32.gmra.mxu0 %v1340
        %v1342 = vpop.f32.mrf.mxu0
        %v1343 = vadd.f32 %v1302, %v1342
        %1344 = vdwg.mxu0
        %v1345 = vand.u32 %v248, 4294901760
        %v1346 = vsub.f32 %v248, %v1345
        %v1347 = vand.u32 %v1346, 4294901760
        %v1348 = vsub.f32 %v1346, %v1347
        %v1349 = vand.u32 %v1348, 4294901760
        %1350 = vmatpush.msra.mxu0 %v1349
        %v1351 = vand.u32 %v247, 4294901760
        %v1352 = vsub.f32 %v247, %v1351
        %v1353 = vand.u32 %v1352, 4294901760
        %v1354 = vsub.f32 %v1352, %v1353
        %v1355 = vand.u32 %v1354, 4294901760
        %1356 = vmatpush.msra.mxu0 %v1355
        %v1357 = vand.u32 %v246, 4294901760
        %v1358 = vsub.f32 %v246, %v1357
        %v1359 = vand.u32 %v1358, 4294901760
        %v1360 = vsub.f32 %v1358, %v1359
        %v1361 = vand.u32 %v1360, 4294901760
        %1362 = vmatpush.msra.mxu0 %v1361
        %v1363 = vand.u32 %v245, 4294901760
        %v1364 = vsub.f32 %v245, %v1363
        %v1365 = vand.u32 %v1364, 4294901760
        %v1366 = vsub.f32 %v1364, %v1365
        %v1367 = vand.u32 %v1366, 4294901760
        %1368 = vmatpush.msra.mxu0 %v1367
        %v1369 = vand.u32 %v244, 4294901760
        %v1370 = vsub.f32 %v244, %v1369
        %v1371 = vand.u32 %v1370, 4294901760
        %v1372 = vsub.f32 %v1370, %v1371
        %v1373 = vand.u32 %v1372, 4294901760
        %1374 = vmatpush.msra.mxu0 %v1373
        %v1375 = vand.u32 %v243, 4294901760
        %v1376 = vsub.f32 %v243, %v1375
        %v1377 = vand.u32 %v1376, 4294901760
        %v1378 = vsub.f32 %v1376, %v1377
        %v1379 = vand.u32 %v1378, 4294901760
        %1380 = vmatpush.msra.mxu0 %v1379
        %v1381 = vand.u32 %v242, 4294901760
        %v1382 = vsub.f32 %v242, %v1381
        %v1383 = vand.u32 %v1382, 4294901760
        %v1384 = vsub.f32 %v1382, %v1383
        %v1385 = vand.u32 %v1384, 4294901760
        %1386 = vmatpush.msra.mxu0 %v1385
        %v1387 = vand.u32 %v241, 4294901760
        %v1388 = vsub.f32 %v241, %v1387
        %v1389 = vand.u32 %v1388, 4294901760
        %v1390 = vsub.f32 %v1388, %v1389
        %v1391 = vand.u32 %v1390, 4294901760
        %1392 = vmatpush.msra.mxu0 %v1391
        %v1393 = vand.u32 %v240, 4294901760
        %v1394 = vsub.f32 %v240, %v1393
        %v1395 = vand.u32 %v1394, 4294901760
        %v1396 = vsub.f32 %v1394, %v1395
        %v1397 = vand.u32 %v1396, 4294901760
        %1398 = vmatpush.msra.mxu0 %v1397
        %v1399 = vand.u32 %v239, 4294901760
        %v1400 = vsub.f32 %v239, %v1399
        %v1401 = vand.u32 %v1400, 4294901760
        %v1402 = vsub.f32 %v1400, %v1401
        %v1403 = vand.u32 %v1402, 4294901760
        %1404 = vmatpush.msra.mxu0 %v1403
        %v1405 = vand.u32 %v238, 4294901760
        %v1406 = vsub.f32 %v238, %v1405
        %v1407 = vand.u32 %v1406, 4294901760
        %v1408 = vsub.f32 %v1406, %v1407
        %v1409 = vand.u32 %v1408, 4294901760
        %1410 = vmatpush.msra.mxu0 %v1409
        %v1411 = vand.u32 %v237, 4294901760
        %v1412 = vsub.f32 %v237, %v1411
        %v1413 = vand.u32 %v1412, 4294901760
        %v1414 = vsub.f32 %v1412, %v1413
        %v1415 = vand.u32 %v1414, 4294901760
        %1416 = vmatpush.msra.mxu0 %v1415
        %v1417 = vand.u32 %v236, 4294901760
        %v1418 = vsub.f32 %v236, %v1417
        %v1419 = vand.u32 %v1418, 4294901760
        %v1420 = vsub.f32 %v1418, %v1419
        %v1421 = vand.u32 %v1420, 4294901760
        %1422 = vmatpush.msra.mxu0 %v1421
        %v1423 = vand.u32 %v235, 4294901760
        %v1424 = vsub.f32 %v235, %v1423
        %v1425 = vand.u32 %v1424, 4294901760
        %v1426 = vsub.f32 %v1424, %v1425
        %v1427 = vand.u32 %v1426, 4294901760
        %1428 = vmatpush.msra.mxu0 %v1427
        %v1429 = vand.u32 %v234, 4294901760
        %v1430 = vsub.f32 %v234, %v1429
        %v1431 = vand.u32 %v1430, 4294901760
        %v1432 = vsub.f32 %v1430, %v1431
        %v1433 = vand.u32 %v1432, 4294901760
        %1434 = vmatpush.msra.mxu0 %v1433
        %v1435 = vand.u32 %v233, 4294901760
        %v1436 = vsub.f32 %v233, %v1435
        %v1437 = vand.u32 %v1436, 4294901760
        %v1438 = vsub.f32 %v1436, %v1437
        %v1439 = vand.u32 %v1438, 4294901760
        %1440 = vmatpush.msra.mxu0 %v1439
        %v1441 = vand.u32 %v182, 4294901760
        %1442 = vmatmul.f32.gmra.mxu0 %v1441
        %v1443 = vpop.f32.mrf.mxu0
        %v1444 = vadd.f32 %v1343, %v1443
        %1445 = vdwg.mxu0
        %v1446 = vand.u32 %v248, 4294901760
        %v1447 = vsub.f32 %v248, %v1446
        %1448 = vmatpush.msra.mxu0 %v1447
        %v1449 = vand.u32 %v247, 4294901760
        %v1450 = vsub.f32 %v247, %v1449
        %1451 = vmatpush.msra.mxu0 %v1450
        %v1452 = vand.u32 %v246, 4294901760
        %v1453 = vsub.f32 %v246, %v1452
        %1454 = vmatpush.msra.mxu0 %v1453
        %v1455 = vand.u32 %v245, 4294901760
        %v1456 = vsub.f32 %v245, %v1455
        %1457 = vmatpush.msra.mxu0 %v1456
        %v1458 = vand.u32 %v244, 4294901760
        %v1459 = vsub.f32 %v244, %v1458
        %1460 = vmatpush.msra.mxu0 %v1459
        %v1461 = vand.u32 %v243, 4294901760
        %v1462 = vsub.f32 %v243, %v1461
        %1463 = vmatpush.msra.mxu0 %v1462
        %v1464 = vand.u32 %v242, 4294901760
        %v1465 = vsub.f32 %v242, %v1464
        %1466 = vmatpush.msra.mxu0 %v1465
        %v1467 = vand.u32 %v241, 4294901760
        %v1468 = vsub.f32 %v241, %v1467
        %1469 = vmatpush.msra.mxu0 %v1468
        %v1470 = vand.u32 %v240, 4294901760
        %v1471 = vsub.f32 %v240, %v1470
        %1472 = vmatpush.msra.mxu0 %v1471
        %v1473 = vand.u32 %v239, 4294901760
        %v1474 = vsub.f32 %v239, %v1473
        %1475 = vmatpush.msra.mxu0 %v1474
        %v1476 = vand.u32 %v238, 4294901760
        %v1477 = vsub.f32 %v238, %v1476
        %1478 = vmatpush.msra.mxu0 %v1477
        %v1479 = vand.u32 %v237, 4294901760
        %v1480 = vsub.f32 %v237, %v1479
        %1481 = vmatpush.msra.mxu0 %v1480
        %v1482 = vand.u32 %v236, 4294901760
        %v1483 = vsub.f32 %v236, %v1482
        %1484 = vmatpush.msra.mxu0 %v1483
        %v1485 = vand.u32 %v235, 4294901760
        %v1486 = vsub.f32 %v235, %v1485
        %1487 = vmatpush.msra.mxu0 %v1486
        %v1488 = vand.u32 %v234, 4294901760
        %v1489 = vsub.f32 %v234, %v1488
        %1490 = vmatpush.msra.mxu0 %v1489
        %v1491 = vand.u32 %v233, 4294901760
        %v1492 = vsub.f32 %v233, %v1491
        %1493 = vmatpush.msra.mxu0 %v1492
        %v1494 = vand.u32 %v182, 4294901760
        %v1495 = vsub.f32 %v182, %v1494
        %1496 = vmatmul.f32.gmra.mxu0 %v1495
        %v1497 = vpop.f32.mrf.mxu0
        %v1498 = vadd.f32 %v1444, %v1497
        %1499 = vdwg.mxu0
        %v1500 = vand.u32 %v248, 4294901760
        %1501 = vmatpush.msra.mxu0 %v1500
        %v1502 = vand.u32 %v247, 4294901760
        %1503 = vmatpush.msra.mxu0 %v1502
        %v1504 = vand.u32 %v246, 4294901760
        %1505 = vmatpush.msra.mxu0 %v1504
        %v1506 = vand.u32 %v245, 4294901760
        %1507 = vmatpush.msra.mxu0 %v1506
        %v1508 = vand.u32 %v244, 4294901760
        %1509 = vmatpush.msra.mxu0 %v1508
        %v1510 = vand.u32 %v243, 4294901760
        %1511 = vmatpush.msra.mxu0 %v1510
        %v1512 = vand.u32 %v242, 4294901760
        %1513 = vmatpush.msra.mxu0 %v1512
        %v1514 = vand.u32 %v241, 4294901760
        %1515 = vmatpush.msra.mxu0 %v1514
        %v1516 = vand.u32 %v240, 4294901760
        %1517 = vmatpush.msra.mxu0 %v1516
        %v1518 = vand.u32 %v239, 4294901760
        %1519 = vmatpush.msra.mxu0 %v1518
        %v1520 = vand.u32 %v238, 4294901760
        %1521 = vmatpush.msra.mxu0 %v1520
        %v1522 = vand.u32 %v237, 4294901760
        %1523 = vmatpush.msra.mxu0 %v1522
        %v1524 = vand.u32 %v236, 4294901760
        %1525 = vmatpush.msra.mxu0 %v1524
        %v1526 = vand.u32 %v235, 4294901760
        %1527 = vmatpush.msra.mxu0 %v1526
        %v1528 = vand.u32 %v234, 4294901760
        %1529 = vmatpush.msra.mxu0 %v1528
        %v1530 = vand.u32 %v233, 4294901760
        %1531 = vmatpush.msra.mxu0 %v1530
        %v1532 = vand.u32 %v182, 4294901760
        %v1533 = vsub.f32 %v182, %v1532
        %v1534 = vand.u32 %v1533, 4294901760
        %1535 = vmatmul.f32.gmra.mxu0 %v1534
        %v1536 = vpop.f32.mrf.mxu0
        %v1537 = vadd.f32 %v1498, %v1536
        %1538 = vdwg.mxu0
        %v1539 = vand.u32 %v248, 4294901760
        %v1540 = vsub.f32 %v248, %v1539
        %v1541 = vand.u32 %v1540, 4294901760
        %1542 = vmatpush.msra.mxu0 %v1541
        %v1543 = vand.u32 %v247, 4294901760
        %v1544 = vsub.f32 %v247, %v1543
        %v1545 = vand.u32 %v1544, 4294901760
        %1546 = vmatpush.msra.mxu0 %v1545
        %v1547 = vand.u32 %v246, 4294901760
        %v1548 = vsub.f32 %v246, %v1547
        %v1549 = vand.u32 %v1548, 4294901760
        %1550 = vmatpush.msra.mxu0 %v1549
        %v1551 = vand.u32 %v245, 4294901760
        %v1552 = vsub.f32 %v245, %v1551
        %v1553 = vand.u32 %v1552, 4294901760
        %1554 = vmatpush.msra.mxu0 %v1553
        %v1555 = vand.u32 %v244, 4294901760
        %v1556 = vsub.f32 %v244, %v1555
        %v1557 = vand.u32 %v1556, 4294901760
        %1558 = vmatpush.msra.mxu0 %v1557
        %v1559 = vand.u32 %v243, 4294901760
        %v1560 = vsub.f32 %v243, %v1559
        %v1561 = vand.u32 %v1560, 4294901760
        %1562 = vmatpush.msra.mxu0 %v1561
        %v1563 = vand.u32 %v242, 4294901760
        %v1564 = vsub.f32 %v242, %v1563
        %v1565 = vand.u32 %v1564, 4294901760
        %1566 = vmatpush.msra.mxu0 %v1565
        %v1567 = vand.u32 %v241, 4294901760
        %v1568 = vsub.f32 %v241, %v1567
        %v1569 = vand.u32 %v1568, 4294901760
        %1570 = vmatpush.msra.mxu0 %v1569
        %v1571 = vand.u32 %v240, 4294901760
        %v1572 = vsub.f32 %v240, %v1571
        %v1573 = vand.u32 %v1572, 4294901760
        %1574 = vmatpush.msra.mxu0 %v1573
        %v1575 = vand.u32 %v239, 4294901760
        %v1576 = vsub.f32 %v239, %v1575
        %v1577 = vand.u32 %v1576, 4294901760
        %1578 = vmatpush.msra.mxu0 %v1577
        %v1579 = vand.u32 %v238, 4294901760
        %v1580 = vsub.f32 %v238, %v1579
        %v1581 = vand.u32 %v1580, 4294901760
        %1582 = vmatpush.msra.mxu0 %v1581
        %v1583 = vand.u32 %v237, 4294901760
        %v1584 = vsub.f32 %v237, %v1583
        %v1585 = vand.u32 %v1584, 4294901760
        %1586 = vmatpush.msra.mxu0 %v1585
        %v1587 = vand.u32 %v236, 4294901760
        %v1588 = vsub.f32 %v236, %v1587
        %v1589 = vand.u32 %v1588, 4294901760
        %1590 = vmatpush.msra.mxu0 %v1589
        %v1591 = vand.u32 %v235, 4294901760
        %v1592 = vsub.f32 %v235, %v1591
        %v1593 = vand.u32 %v1592, 4294901760
        %1594 = vmatpush.msra.mxu0 %v1593
        %v1595 = vand.u32 %v234, 4294901760
        %v1596 = vsub.f32 %v234, %v1595
        %v1597 = vand.u32 %v1596, 4294901760
        %1598 = vmatpush.msra.mxu0 %v1597
        %v1599 = vand.u32 %v233, 4294901760
        %v1600 = vsub.f32 %v233, %v1599
        %v1601 = vand.u32 %v1600, 4294901760
        %1602 = vmatpush.msra.mxu0 %v1601
        %v1603 = vand.u32 %v182, 4294901760
        %1604 = vmatmul.f32.gmra.mxu0 %v1603
        %v1605 = vpop.f32.mrf.mxu0
        %v1606 = vadd.f32 %v1537, %v1605
        %1607 = vdwg.mxu0
        %v1608 = vand.u32 %v248, 4294901760
        %1609 = vmatpush.msra.mxu0 %v1608
        %v1610 = vand.u32 %v247, 4294901760
        %1611 = vmatpush.msra.mxu0 %v1610
        %v1612 = vand.u32 %v246, 4294901760
        %1613 = vmatpush.msra.mxu0 %v1612
        %v1614 = vand.u32 %v245, 4294901760
        %1615 = vmatpush.msra.mxu0 %v1614
        %v1616 = vand.u32 %v244, 4294901760
        %1617 = vmatpush.msra.mxu0 %v1616
        %v1618 = vand.u32 %v243, 4294901760
        %1619 = vmatpush.msra.mxu0 %v1618
        %v1620 = vand.u32 %v242, 4294901760
        %1621 = vmatpush.msra.mxu0 %v1620
        %v1622 = vand.u32 %v241, 4294901760
        %1623 = vmatpush.msra.mxu0 %v1622
        %v1624 = vand.u32 %v240, 4294901760
        %1625 = vmatpush.msra.mxu0 %v1624
        %v1626 = vand.u32 %v239, 4294901760
        %1627 = vmatpush.msra.mxu0 %v1626
        %v1628 = vand.u32 %v238, 4294901760
        %1629 = vmatpush.msra.mxu0 %v1628
        %v1630 = vand.u32 %v237, 4294901760
        %1631 = vmatpush.msra.mxu0 %v1630
        %v1632 = vand.u32 %v236, 4294901760
        %1633 = vmatpush.msra.mxu0 %v1632
        %v1634 = vand.u32 %v235, 4294901760
        %1635 = vmatpush.msra.mxu0 %v1634
        %v1636 = vand.u32 %v234, 4294901760
        %1637 = vmatpush.msra.mxu0 %v1636
        %v1638 = vand.u32 %v233, 4294901760
        %1639 = vmatpush.msra.mxu0 %v1638
        %v1640 = vand.u32 %v182, 4294901760
        %1641 = vmatmul.f32.gmra.mxu0 %v1640
        %v1642 = vpop.f32.mrf.mxu0
        %v1643 = vadd.f32 %v1606, %v1642
        %1644 = vdwg.mxu0
        %v1645 = vand.u32 %v264, 4294901760
        %1646 = vmatpush.msra.mxu0 %v1645
        %v1647 = vand.u32 %v263, 4294901760
        %1648 = vmatpush.msra.mxu0 %v1647
        %v1649 = vand.u32 %v262, 4294901760
        %1650 = vmatpush.msra.mxu0 %v1649
        %v1651 = vand.u32 %v261, 4294901760
        %1652 = vmatpush.msra.mxu0 %v1651
        %v1653 = vand.u32 %v260, 4294901760
        %1654 = vmatpush.msra.mxu0 %v1653
        %v1655 = vand.u32 %v259, 4294901760
        %1656 = vmatpush.msra.mxu0 %v1655
        %v1657 = vand.u32 %v258, 4294901760
        %1658 = vmatpush.msra.mxu0 %v1657
        %v1659 = vand.u32 %v257, 4294901760
        %1660 = vmatpush.msra.mxu0 %v1659
        %v1661 = vand.u32 %v256, 4294901760
        %1662 = vmatpush.msra.mxu0 %v1661
        %v1663 = vand.u32 %v255, 4294901760
        %1664 = vmatpush.msra.mxu0 %v1663
        %v1665 = vand.u32 %v254, 4294901760
        %1666 = vmatpush.msra.mxu0 %v1665
        %v1667 = vand.u32 %v253, 4294901760
        %1668 = vmatpush.msra.mxu0 %v1667
        %v1669 = vand.u32 %v252, 4294901760
        %1670 = vmatpush.msra.mxu0 %v1669
        %v1671 = vand.u32 %v251, 4294901760
        %1672 = vmatpush.msra.mxu0 %v1671
        %v1673 = vand.u32 %v250, 4294901760
        %1674 = vmatpush.msra.mxu0 %v1673
        %v1675 = vand.u32 %v249, 4294901760
        %1676 = vmatpush.msra.mxu0 %v1675
        %v1677 = vand.u32 %v183, 4294901760
        %v1678 = vsub.f32 %v183, %v1677
        %v1679 = vand.u32 %v1678, 4294901760
        %v1680 = vsub.f32 %v1678, %v1679
        %v1681 = vand.u32 %v1680, 4294901760
        %1682 = vmatmul.f32.gmra.mxu0 %v1681
        %v1683 = vpop.f32.mrf.mxu0
        %v1684 = vadd.f32 %v1643, %v1683
        %1685 = vdwg.mxu0
        %v1686 = vand.u32 %v264, 4294901760
        %v1687 = vsub.f32 %v264, %v1686
        %v1688 = vand.u32 %v1687, 4294901760
        %v1689 = vsub.f32 %v1687, %v1688
        %v1690 = vand.u32 %v1689, 4294901760
        %1691 = vmatpush.msra.mxu0 %v1690
        %v1692 = vand.u32 %v263, 4294901760
        %v1693 = vsub.f32 %v263, %v1692
        %v1694 = vand.u32 %v1693, 4294901760
        %v1695 = vsub.f32 %v1693, %v1694
        %v1696 = vand.u32 %v1695, 4294901760
        %1697 = vmatpush.msra.mxu0 %v1696
        %v1698 = vand.u32 %v262, 4294901760
        %v1699 = vsub.f32 %v262, %v1698
        %v1700 = vand.u32 %v1699, 4294901760
        %v1701 = vsub.f32 %v1699, %v1700
        %v1702 = vand.u32 %v1701, 4294901760
        %1703 = vmatpush.msra.mxu0 %v1702
        %v1704 = vand.u32 %v261, 4294901760
        %v1705 = vsub.f32 %v261, %v1704
        %v1706 = vand.u32 %v1705, 4294901760
        %v1707 = vsub.f32 %v1705, %v1706
        %v1708 = vand.u32 %v1707, 4294901760
        %1709 = vmatpush.msra.mxu0 %v1708
        %v1710 = vand.u32 %v260, 4294901760
        %v1711 = vsub.f32 %v260, %v1710
        %v1712 = vand.u32 %v1711, 4294901760
        %v1713 = vsub.f32 %v1711, %v1712
        %v1714 = vand.u32 %v1713, 4294901760
        %1715 = vmatpush.msra.mxu0 %v1714
        %v1716 = vand.u32 %v259, 4294901760
        %v1717 = vsub.f32 %v259, %v1716
        %v1718 = vand.u32 %v1717, 4294901760
        %v1719 = vsub.f32 %v1717, %v1718
        %v1720 = vand.u32 %v1719, 4294901760
        %1721 = vmatpush.msra.mxu0 %v1720
        %v1722 = vand.u32 %v258, 4294901760
        %v1723 = vsub.f32 %v258, %v1722
        %v1724 = vand.u32 %v1723, 4294901760
        %v1725 = vsub.f32 %v1723, %v1724
        %v1726 = vand.u32 %v1725, 4294901760
        %1727 = vmatpush.msra.mxu0 %v1726
        %v1728 = vand.u32 %v257, 4294901760
        %v1729 = vsub.f32 %v257, %v1728
        %v1730 = vand.u32 %v1729, 4294901760
        %v1731 = vsub.f32 %v1729, %v1730
        %v1732 = vand.u32 %v1731, 4294901760
        %1733 = vmatpush.msra.mxu0 %v1732
        %v1734 = vand.u32 %v256, 4294901760
        %v1735 = vsub.f32 %v256, %v1734
        %v1736 = vand.u32 %v1735, 4294901760
        %v1737 = vsub.f32 %v1735, %v1736
        %v1738 = vand.u32 %v1737, 4294901760
        %1739 = vmatpush.msra.mxu0 %v1738
        %v1740 = vand.u32 %v255, 4294901760
        %v1741 = vsub.f32 %v255, %v1740
        %v1742 = vand.u32 %v1741, 4294901760
        %v1743 = vsub.f32 %v1741, %v1742
        %v1744 = vand.u32 %v1743, 4294901760
        %1745 = vmatpush.msra.mxu0 %v1744
        %v1746 = vand.u32 %v254, 4294901760
        %v1747 = vsub.f32 %v254, %v1746
        %v1748 = vand.u32 %v1747, 4294901760
        %v1749 = vsub.f32 %v1747, %v1748
        %v1750 = vand.u32 %v1749, 4294901760
        %1751 = vmatpush.msra.mxu0 %v1750
        %v1752 = vand.u32 %v253, 4294901760
        %v1753 = vsub.f32 %v253, %v1752
        %v1754 = vand.u32 %v1753, 4294901760
        %v1755 = vsub.f32 %v1753, %v1754
        %v1756 = vand.u32 %v1755, 4294901760
        %1757 = vmatpush.msra.mxu0 %v1756
        %v1758 = vand.u32 %v252, 4294901760
        %v1759 = vsub.f32 %v252, %v1758
        %v1760 = vand.u32 %v1759, 4294901760
        %v1761 = vsub.f32 %v1759, %v1760
        %v1762 = vand.u32 %v1761, 4294901760
        %1763 = vmatpush.msra.mxu0 %v1762
        %v1764 = vand.u32 %v251, 4294901760
        %v1765 = vsub.f32 %v251, %v1764
        %v1766 = vand.u32 %v1765, 4294901760
        %v1767 = vsub.f32 %v1765, %v1766
        %v1768 = vand.u32 %v1767, 4294901760
        %1769 = vmatpush.msra.mxu0 %v1768
        %v1770 = vand.u32 %v250, 4294901760
        %v1771 = vsub.f32 %v250, %v1770
        %v1772 = vand.u32 %v1771, 4294901760
        %v1773 = vsub.f32 %v1771, %v1772
        %v1774 = vand.u32 %v1773, 4294901760
        %1775 = vmatpush.msra.mxu0 %v1774
        %v1776 = vand.u32 %v249, 4294901760
        %v1777 = vsub.f32 %v249, %v1776
        %v1778 = vand.u32 %v1777, 4294901760
        %v1779 = vsub.f32 %v1777, %v1778
        %v1780 = vand.u32 %v1779, 4294901760
        %1781 = vmatpush.msra.mxu0 %v1780
        %v1782 = vand.u32 %v183, 4294901760
        %1783 = vmatmul.f32.gmra.mxu0 %v1782
        %v1784 = vpop.f32.mrf.mxu0
        %v1785 = vadd.f32 %v1684, %v1784
        %1786 = vdwg.mxu0
        %v1787 = vand.u32 %v264, 4294901760
        %v1788 = vsub.f32 %v264, %v1787
        %1789 = vmatpush.msra.mxu0 %v1788
        %v1790 = vand.u32 %v263, 4294901760
        %v1791 = vsub.f32 %v263, %v1790
        %1792 = vmatpush.msra.mxu0 %v1791
        %v1793 = vand.u32 %v262, 4294901760
        %v1794 = vsub.f32 %v262, %v1793
        %1795 = vmatpush.msra.mxu0 %v1794
        %v1796 = vand.u32 %v261, 4294901760
        %v1797 = vsub.f32 %v261, %v1796
        %1798 = vmatpush.msra.mxu0 %v1797
        %v1799 = vand.u32 %v260, 4294901760
        %v1800 = vsub.f32 %v260, %v1799
        %1801 = vmatpush.msra.mxu0 %v1800
        %v1802 = vand.u32 %v259, 4294901760
        %v1803 = vsub.f32 %v259, %v1802
        %1804 = vmatpush.msra.mxu0 %v1803
        %v1805 = vand.u32 %v258, 4294901760
        %v1806 = vsub.f32 %v258, %v1805
        %1807 = vmatpush.msra.mxu0 %v1806
        %v1808 = vand.u32 %v257, 4294901760
        %v1809 = vsub.f32 %v257, %v1808
        %1810 = vmatpush.msra.mxu0 %v1809
        %v1811 = vand.u32 %v256, 4294901760
        %v1812 = vsub.f32 %v256, %v1811
        %1813 = vmatpush.msra.mxu0 %v1812
        %v1814 = vand.u32 %v255, 4294901760
        %v1815 = vsub.f32 %v255, %v1814
        %1816 = vmatpush.msra.mxu0 %v1815
        %v1817 = vand.u32 %v254, 4294901760
        %v1818 = vsub.f32 %v254, %v1817
        %1819 = vmatpush.msra.mxu0 %v1818
        %v1820 = vand.u32 %v253, 4294901760
        %v1821 = vsub.f32 %v253, %v1820
        %1822 = vmatpush.msra.mxu0 %v1821
        %v1823 = vand.u32 %v252, 4294901760
        %v1824 = vsub.f32 %v252, %v1823
        %1825 = vmatpush.msra.mxu0 %v1824
        %v1826 = vand.u32 %v251, 4294901760
        %v1827 = vsub.f32 %v251, %v1826
        %1828 = vmatpush.msra.mxu0 %v1827
        %v1829 = vand.u32 %v250, 4294901760
        %v1830 = vsub.f32 %v250, %v1829
        %1831 = vmatpush.msra.mxu0 %v1830
        %v1832 = vand.u32 %v249, 4294901760
        %v1833 = vsub.f32 %v249, %v1832
        %1834 = vmatpush.msra.mxu0 %v1833
        %v1835 = vand.u32 %v183, 4294901760
        %v1836 = vsub.f32 %v183, %v1835
        %1837 = vmatmul.f32.gmra.mxu0 %v1836
        %v1838 = vpop.f32.mrf.mxu0
        %v1839 = vadd.f32 %v1785, %v1838
        %1840 = vdwg.mxu0
        %v1841 = vand.u32 %v264, 4294901760
        %1842 = vmatpush.msra.mxu0 %v1841
        %v1843 = vand.u32 %v263, 4294901760
        %1844 = vmatpush.msra.mxu0 %v1843
        %v1845 = vand.u32 %v262, 4294901760
        %1846 = vmatpush.msra.mxu0 %v1845
        %v1847 = vand.u32 %v261, 4294901760
        %1848 = vmatpush.msra.mxu0 %v1847
        %v1849 = vand.u32 %v260, 4294901760
        %1850 = vmatpush.msra.mxu0 %v1849
        %v1851 = vand.u32 %v259, 4294901760
        %1852 = vmatpush.msra.mxu0 %v1851
        %v1853 = vand.u32 %v258, 4294901760
        %1854 = vmatpush.msra.mxu0 %v1853
        %v1855 = vand.u32 %v257, 4294901760
        %1856 = vmatpush.msra.mxu0 %v1855
        %v1857 = vand.u32 %v256, 4294901760
        %1858 = vmatpush.msra.mxu0 %v1857
        %v1859 = vand.u32 %v255, 4294901760
        %1860 = vmatpush.msra.mxu0 %v1859
        %v1861 = vand.u32 %v254, 4294901760
        %1862 = vmatpush.msra.mxu0 %v1861
        %v1863 = vand.u32 %v253, 4294901760
        %1864 = vmatpush.msra.mxu0 %v1863
        %v1865 = vand.u32 %v252, 4294901760
        %1866 = vmatpush.msra.mxu0 %v1865
        %v1867 = vand.u32 %v251, 4294901760
        %1868 = vmatpush.msra.mxu0 %v1867
        %v1869 = vand.u32 %v250, 4294901760
        %1870 = vmatpush.msra.mxu0 %v1869
        %v1871 = vand.u32 %v249, 4294901760
        %1872 = vmatpush.msra.mxu0 %v1871
        %v1873 = vand.u32 %v183, 4294901760
        %v1874 = vsub.f32 %v183, %v1873
        %v1875 = vand.u32 %v1874, 4294901760
        %1876 = vmatmul.f32.gmra.mxu0 %v1875
        %v1877 = vpop.f32.mrf.mxu0
        %v1878 = vadd.f32 %v1839, %v1877
        %1879 = vdwg.mxu0
        %v1880 = vand.u32 %v264, 4294901760
        %v1881 = vsub.f32 %v264, %v1880
        %v1882 = vand.u32 %v1881, 4294901760
        %1883 = vmatpush.msra.mxu0 %v1882
        %v1884 = vand.u32 %v263, 4294901760
        %v1885 = vsub.f32 %v263, %v1884
        %v1886 = vand.u32 %v1885, 4294901760
        %1887 = vmatpush.msra.mxu0 %v1886
        %v1888 = vand.u32 %v262, 4294901760
        %v1889 = vsub.f32 %v262, %v1888
        %v1890 = vand.u32 %v1889, 4294901760
        %1891 = vmatpush.msra.mxu0 %v1890
        %v1892 = vand.u32 %v261, 4294901760
        %v1893 = vsub.f32 %v261, %v1892
        %v1894 = vand.u32 %v1893, 4294901760
        %1895 = vmatpush.msra.mxu0 %v1894
        %v1896 = vand.u32 %v260, 4294901760
        %v1897 = vsub.f32 %v260, %v1896
        %v1898 = vand.u32 %v1897, 4294901760
        %1899 = vmatpush.msra.mxu0 %v1898
        %v1900 = vand.u32 %v259, 4294901760
        %v1901 = vsub.f32 %v259, %v1900
        %v1902 = vand.u32 %v1901, 4294901760
        %1903 = vmatpush.msra.mxu0 %v1902
        %v1904 = vand.u32 %v258, 4294901760
        %v1905 = vsub.f32 %v258, %v1904
        %v1906 = vand.u32 %v1905, 4294901760
        %1907 = vmatpush.msra.mxu0 %v1906
        %v1908 = vand.u32 %v257, 4294901760
        %v1909 = vsub.f32 %v257, %v1908
        %v1910 = vand.u32 %v1909, 4294901760
        %1911 = vmatpush.msra.mxu0 %v1910
        %v1912 = vand.u32 %v256, 4294901760
        %v1913 = vsub.f32 %v256, %v1912
        %v1914 = vand.u32 %v1913, 4294901760
        %1915 = vmatpush.msra.mxu0 %v1914
        %v1916 = vand.u32 %v255, 4294901760
        %v1917 = vsub.f32 %v255, %v1916
        %v1918 = vand.u32 %v1917, 4294901760
        %1919 = vmatpush.msra.mxu0 %v1918
        %v1920 = vand.u32 %v254, 4294901760
        %v1921 = vsub.f32 %v254, %v1920
        %v1922 = vand.u32 %v1921, 4294901760
        %1923 = vmatpush.msra.mxu0 %v1922
        %v1924 = vand.u32 %v253, 4294901760
        %v1925 = vsub.f32 %v253, %v1924
        %v1926 = vand.u32 %v1925, 4294901760
        %1927 = vmatpush.msra.mxu0 %v1926
        %v1928 = vand.u32 %v252, 4294901760
        %v1929 = vsub.f32 %v252, %v1928
        %v1930 = vand.u32 %v1929, 4294901760
        %1931 = vmatpush.msra.mxu0 %v1930
        %v1932 = vand.u32 %v251, 4294901760
        %v1933 = vsub.f32 %v251, %v1932
        %v1934 = vand.u32 %v1933, 4294901760
        %1935 = vmatpush.msra.mxu0 %v1934
        %v1936 = vand.u32 %v250, 4294901760
        %v1937 = vsub.f32 %v250, %v1936
        %v1938 = vand.u32 %v1937, 4294901760
        %1939 = vmatpush.msra.mxu0 %v1938
        %v1940 = vand.u32 %v249, 4294901760
        %v1941 = vsub.f32 %v249, %v1940
        %v1942 = vand.u32 %v1941, 4294901760
        %1943 = vmatpush.msra.mxu0 %v1942
        %v1944 = vand.u32 %v183, 4294901760
        %1945 = vmatmul.f32.gmra.mxu0 %v1944
        %v1946 = vpop.f32.mrf.mxu0
        %v1947 = vadd.f32 %v1878, %v1946
        %1948 = vdwg.mxu0
        %v1949 = vand.u32 %v264, 4294901760
        %1950 = vmatpush.msra.mxu0 %v1949
        %v1951 = vand.u32 %v263, 4294901760
        %1952 = vmatpush.msra.mxu0 %v1951
        %v1953 = vand.u32 %v262, 4294901760
        %1954 = vmatpush.msra.mxu0 %v1953
        %v1955 = vand.u32 %v261, 4294901760
        %1956 = vmatpush.msra.mxu0 %v1955
        %v1957 = vand.u32 %v260, 4294901760
        %1958 = vmatpush.msra.mxu0 %v1957
        %v1959 = vand.u32 %v259, 4294901760
        %1960 = vmatpush.msra.mxu0 %v1959
        %v1961 = vand.u32 %v258, 4294901760
        %1962 = vmatpush.msra.mxu0 %v1961
        %v1963 = vand.u32 %v257, 4294901760
        %1964 = vmatpush.msra.mxu0 %v1963
        %v1965 = vand.u32 %v256, 4294901760
        %1966 = vmatpush.msra.mxu0 %v1965
        %v1967 = vand.u32 %v255, 4294901760
        %1968 = vmatpush.msra.mxu0 %v1967
        %v1969 = vand.u32 %v254, 4294901760
        %1970 = vmatpush.msra.mxu0 %v1969
        %v1971 = vand.u32 %v253, 4294901760
        %1972 = vmatpush.msra.mxu0 %v1971
        %v1973 = vand.u32 %v252, 4294901760
        %1974 = vmatpush.msra.mxu0 %v1973
        %v1975 = vand.u32 %v251, 4294901760
        %1976 = vmatpush.msra.mxu0 %v1975
        %v1977 = vand.u32 %v250, 4294901760
        %1978 = vmatpush.msra.mxu0 %v1977
        %v1979 = vand.u32 %v249, 4294901760
        %1980 = vmatpush.msra.mxu0 %v1979
        %v1981 = vand.u32 %v183, 4294901760
        %1982 = vmatmul.f32.gmra.mxu0 %v1981
        %v1983 = vpop.f32.mrf.mxu0
        %v1984 = vadd.f32 %v1947, %v1983
        %1985 = vdwg.mxu0
        %v1986 = vand.u32 %v280, 4294901760
        %1987 = vmatpush.msra.mxu0 %v1986
        %v1988 = vand.u32 %v279, 4294901760
        %1989 = vmatpush.msra.mxu0 %v1988
        %v1990 = vand.u32 %v278, 4294901760
        %1991 = vmatpush.msra.mxu0 %v1990
        %v1992 = vand.u32 %v277, 4294901760
        %1993 = vmatpush.msra.mxu0 %v1992
        %v1994 = vand.u32 %v276, 4294901760
        %1995 = vmatpush.msra.mxu0 %v1994
        %v1996 = vand.u32 %v275, 4294901760
        %1997 = vmatpush.msra.mxu0 %v1996
        %v1998 = vand.u32 %v274, 4294901760
        %1999 = vmatpush.msra.mxu0 %v1998
        %v2000 = vand.u32 %v273, 4294901760
        %2001 = vmatpush.msra.mxu0 %v2000
        %v2002 = vand.u32 %v272, 4294901760
        %2003 = vmatpush.msra.mxu0 %v2002
        %v2004 = vand.u32 %v271, 4294901760
        %2005 = vmatpush.msra.mxu0 %v2004
        %v2006 = vand.u32 %v270, 4294901760
        %2007 = vmatpush.msra.mxu0 %v2006
        %v2008 = vand.u32 %v269, 4294901760
        %2009 = vmatpush.msra.mxu0 %v2008
        %v2010 = vand.u32 %v268, 4294901760
        %2011 = vmatpush.msra.mxu0 %v2010
        %v2012 = vand.u32 %v267, 4294901760
        %2013 = vmatpush.msra.mxu0 %v2012
        %v2014 = vand.u32 %v266, 4294901760
        %2015 = vmatpush.msra.mxu0 %v2014
        %v2016 = vand.u32 %v265, 4294901760
        %2017 = vmatpush.msra.mxu0 %v2016
        %v2018 = vand.u32 %v184, 4294901760
        %v2019 = vsub.f32 %v184, %v2018
        %v2020 = vand.u32 %v2019, 4294901760
        %v2021 = vsub.f32 %v2019, %v2020
        %v2022 = vand.u32 %v2021, 4294901760
        %2023 = vmatmul.f32.gmra.mxu0 %v2022
        %v2024 = vpop.f32.mrf.mxu0
        %v2025 = vadd.f32 %v1984, %v2024
        %2026 = vdwg.mxu0
        %v2027 = vand.u32 %v280, 4294901760
        %v2028 = vsub.f32 %v280, %v2027
        %v2029 = vand.u32 %v2028, 4294901760
        %v2030 = vsub.f32 %v2028, %v2029
        %v2031 = vand.u32 %v2030, 4294901760
        %2032 = vmatpush.msra.mxu0 %v2031
        %v2033 = vand.u32 %v279, 4294901760
        %v2034 = vsub.f32 %v279, %v2033
        %v2035 = vand.u32 %v2034, 4294901760
        %v2036 = vsub.f32 %v2034, %v2035
        %v2037 = vand.u32 %v2036, 4294901760
        %2038 = vmatpush.msra.mxu0 %v2037
        %v2039 = vand.u32 %v278, 4294901760
        %v2040 = vsub.f32 %v278, %v2039
        %v2041 = vand.u32 %v2040, 4294901760
        %v2042 = vsub.f32 %v2040, %v2041
        %v2043 = vand.u32 %v2042, 4294901760
        %2044 = vmatpush.msra.mxu0 %v2043
        %v2045 = vand.u32 %v277, 4294901760
        %v2046 = vsub.f32 %v277, %v2045
        %v2047 = vand.u32 %v2046, 4294901760
        %v2048 = vsub.f32 %v2046, %v2047
        %v2049 = vand.u32 %v2048, 4294901760
        %2050 = vmatpush.msra.mxu0 %v2049
        %v2051 = vand.u32 %v276, 4294901760
        %v2052 = vsub.f32 %v276, %v2051
        %v2053 = vand.u32 %v2052, 4294901760
        %v2054 = vsub.f32 %v2052, %v2053
        %v2055 = vand.u32 %v2054, 4294901760
        %2056 = vmatpush.msra.mxu0 %v2055
        %v2057 = vand.u32 %v275, 4294901760
        %v2058 = vsub.f32 %v275, %v2057
        %v2059 = vand.u32 %v2058, 4294901760
        %v2060 = vsub.f32 %v2058, %v2059
        %v2061 = vand.u32 %v2060, 4294901760
        %2062 = vmatpush.msra.mxu0 %v2061
        %v2063 = vand.u32 %v274, 4294901760
        %v2064 = vsub.f32 %v274, %v2063
        %v2065 = vand.u32 %v2064, 4294901760
        %v2066 = vsub.f32 %v2064, %v2065
        %v2067 = vand.u32 %v2066, 4294901760
        %2068 = vmatpush.msra.mxu0 %v2067
        %v2069 = vand.u32 %v273, 4294901760
        %v2070 = vsub.f32 %v273, %v2069
        %v2071 = vand.u32 %v2070, 4294901760
        %v2072 = vsub.f32 %v2070, %v2071
        %v2073 = vand.u32 %v2072, 4294901760
        %2074 = vmatpush.msra.mxu0 %v2073
        %v2075 = vand.u32 %v272, 4294901760
        %v2076 = vsub.f32 %v272, %v2075
        %v2077 = vand.u32 %v2076, 4294901760
        %v2078 = vsub.f32 %v2076, %v2077
        %v2079 = vand.u32 %v2078, 4294901760
        %2080 = vmatpush.msra.mxu0 %v2079
        %v2081 = vand.u32 %v271, 4294901760
        %v2082 = vsub.f32 %v271, %v2081
        %v2083 = vand.u32 %v2082, 4294901760
        %v2084 = vsub.f32 %v2082, %v2083
        %v2085 = vand.u32 %v2084, 4294901760
        %2086 = vmatpush.msra.mxu0 %v2085
        %v2087 = vand.u32 %v270, 4294901760
        %v2088 = vsub.f32 %v270, %v2087
        %v2089 = vand.u32 %v2088, 4294901760
        %v2090 = vsub.f32 %v2088, %v2089
        %v2091 = vand.u32 %v2090, 4294901760
        %2092 = vmatpush.msra.mxu0 %v2091
        %v2093 = vand.u32 %v269, 4294901760
        %v2094 = vsub.f32 %v269, %v2093
        %v2095 = vand.u32 %v2094, 4294901760
        %v2096 = vsub.f32 %v2094, %v2095
        %v2097 = vand.u32 %v2096, 4294901760
        %2098 = vmatpush.msra.mxu0 %v2097
        %v2099 = vand.u32 %v268, 4294901760
        %v2100 = vsub.f32 %v268, %v2099
        %v2101 = vand.u32 %v2100, 4294901760
        %v2102 = vsub.f32 %v2100, %v2101
        %v2103 = vand.u32 %v2102, 4294901760
        %2104 = vmatpush.msra.mxu0 %v2103
        %v2105 = vand.u32 %v267, 4294901760
        %v2106 = vsub.f32 %v267, %v2105
        %v2107 = vand.u32 %v2106, 4294901760
        %v2108 = vsub.f32 %v2106, %v2107
        %v2109 = vand.u32 %v2108, 4294901760
        %2110 = vmatpush.msra.mxu0 %v2109
        %v2111 = vand.u32 %v266, 4294901760
        %v2112 = vsub.f32 %v266, %v2111
        %v2113 = vand.u32 %v2112, 4294901760
        %v2114 = vsub.f32 %v2112, %v2113
        %v2115 = vand.u32 %v2114, 4294901760
        %2116 = vmatpush.msra.mxu0 %v2115
        %v2117 = vand.u32 %v265, 4294901760
        %v2118 = vsub.f32 %v265, %v2117
        %v2119 = vand.u32 %v2118, 4294901760
        %v2120 = vsub.f32 %v2118, %v2119
        %v2121 = vand.u32 %v2120, 4294901760
        %2122 = vmatpush.msra.mxu0 %v2121
        %v2123 = vand.u32 %v184, 4294901760
        %2124 = vmatmul.f32.gmra.mxu0 %v2123
        %v2125 = vpop.f32.mrf.mxu0
        %v2126 = vadd.f32 %v2025, %v2125
        %2127 = vdwg.mxu0
        %v2128 = vand.u32 %v280, 4294901760
        %v2129 = vsub.f32 %v280, %v2128
        %2130 = vmatpush.msra.mxu0 %v2129
        %v2131 = vand.u32 %v279, 4294901760
        %v2132 = vsub.f32 %v279, %v2131
        %2133 = vmatpush.msra.mxu0 %v2132
        %v2134 = vand.u32 %v278, 4294901760
        %v2135 = vsub.f32 %v278, %v2134
        %2136 = vmatpush.msra.mxu0 %v2135
        %v2137 = vand.u32 %v277, 4294901760
        %v2138 = vsub.f32 %v277, %v2137
        %2139 = vmatpush.msra.mxu0 %v2138
        %v2140 = vand.u32 %v276, 4294901760
        %v2141 = vsub.f32 %v276, %v2140
        %2142 = vmatpush.msra.mxu0 %v2141
        %v2143 = vand.u32 %v275, 4294901760
        %v2144 = vsub.f32 %v275, %v2143
        %2145 = vmatpush.msra.mxu0 %v2144
        %v2146 = vand.u32 %v274, 4294901760
        %v2147 = vsub.f32 %v274, %v2146
        %2148 = vmatpush.msra.mxu0 %v2147
        %v2149 = vand.u32 %v273, 4294901760
        %v2150 = vsub.f32 %v273, %v2149
        %2151 = vmatpush.msra.mxu0 %v2150
        %v2152 = vand.u32 %v272, 4294901760
        %v2153 = vsub.f32 %v272, %v2152
        %2154 = vmatpush.msra.mxu0 %v2153
        %v2155 = vand.u32 %v271, 4294901760
        %v2156 = vsub.f32 %v271, %v2155
        %2157 = vmatpush.msra.mxu0 %v2156
        %v2158 = vand.u32 %v270, 4294901760
        %v2159 = vsub.f32 %v270, %v2158
        %2160 = vmatpush.msra.mxu0 %v2159
        %v2161 = vand.u32 %v269, 4294901760
        %v2162 = vsub.f32 %v269, %v2161
        %2163 = vmatpush.msra.mxu0 %v2162
        %v2164 = vand.u32 %v268, 4294901760
        %v2165 = vsub.f32 %v268, %v2164
        %2166 = vmatpush.msra.mxu0 %v2165
        %v2167 = vand.u32 %v267, 4294901760
        %v2168 = vsub.f32 %v267, %v2167
        %2169 = vmatpush.msra.mxu0 %v2168
        %v2170 = vand.u32 %v266, 4294901760
        %v2171 = vsub.f32 %v266, %v2170
        %2172 = vmatpush.msra.mxu0 %v2171
        %v2173 = vand.u32 %v265, 4294901760
        %v2174 = vsub.f32 %v265, %v2173
        %2175 = vmatpush.msra.mxu0 %v2174
        %v2176 = vand.u32 %v184, 4294901760
        %v2177 = vsub.f32 %v184, %v2176
        %2178 = vmatmul.f32.gmra.mxu0 %v2177
        %v2179 = vpop.f32.mrf.mxu0
        %v2180 = vadd.f32 %v2126, %v2179
        %2181 = vdwg.mxu0
        %v2182 = vand.u32 %v280, 4294901760
        %2183 = vmatpush.msra.mxu0 %v2182
        %v2184 = vand.u32 %v279, 4294901760
        %2185 = vmatpush.msra.mxu0 %v2184
        %v2186 = vand.u32 %v278, 4294901760
        %2187 = vmatpush.msra.mxu0 %v2186
        %v2188 = vand.u32 %v277, 4294901760
        %2189 = vmatpush.msra.mxu0 %v2188
        %v2190 = vand.u32 %v276, 4294901760
        %2191 = vmatpush.msra.mxu0 %v2190
        %v2192 = vand.u32 %v275, 4294901760
        %2193 = vmatpush.msra.mxu0 %v2192
        %v2194 = vand.u32 %v274, 4294901760
        %2195 = vmatpush.msra.mxu0 %v2194
        %v2196 = vand.u32 %v273, 4294901760
        %2197 = vmatpush.msra.mxu0 %v2196
        %v2198 = vand.u32 %v272, 4294901760
        %2199 = vmatpush.msra.mxu0 %v2198
        %v2200 = vand.u32 %v271, 4294901760
        %2201 = vmatpush.msra.mxu0 %v2200
        %v2202 = vand.u32 %v270, 4294901760
        %2203 = vmatpush.msra.mxu0 %v2202
        %v2204 = vand.u32 %v269, 4294901760
        %2205 = vmatpush.msra.mxu0 %v2204
        %v2206 = vand.u32 %v268, 4294901760
        %2207 = vmatpush.msra.mxu0 %v2206
        %v2208 = vand.u32 %v267, 4294901760
        %2209 = vmatpush.msra.mxu0 %v2208
        %v2210 = vand.u32 %v266, 4294901760
        %2211 = vmatpush.msra.mxu0 %v2210
        %v2212 = vand.u32 %v265, 4294901760
        %2213 = vmatpush.msra.mxu0 %v2212
        %v2214 = vand.u32 %v184, 4294901760
        %v2215 = vsub.f32 %v184, %v2214
        %v2216 = vand.u32 %v2215, 4294901760
        %2217 = vmatmul.f32.gmra.mxu0 %v2216
        %v2218 = vpop.f32.mrf.mxu0
        %v2219 = vadd.f32 %v2180, %v2218
        %2220 = vdwg.mxu0
        %v2221 = vand.u32 %v280, 4294901760
        %v2222 = vsub.f32 %v280, %v2221
        %v2223 = vand.u32 %v2222, 4294901760
        %2224 = vmatpush.msra.mxu0 %v2223
        %v2225 = vand.u32 %v279, 4294901760
        %v2226 = vsub.f32 %v279, %v2225
        %v2227 = vand.u32 %v2226, 4294901760
        %2228 = vmatpush.msra.mxu0 %v2227
        %v2229 = vand.u32 %v278, 4294901760
        %v2230 = vsub.f32 %v278, %v2229
        %v2231 = vand.u32 %v2230, 4294901760
        %2232 = vmatpush.msra.mxu0 %v2231
        %v2233 = vand.u32 %v277, 4294901760
        %v2234 = vsub.f32 %v277, %v2233
        %v2235 = vand.u32 %v2234, 4294901760
        %2236 = vmatpush.msra.mxu0 %v2235
        %v2237 = vand.u32 %v276, 4294901760
        %v2238 = vsub.f32 %v276, %v2237
        %v2239 = vand.u32 %v2238, 4294901760
        %2240 = vmatpush.msra.mxu0 %v2239
        %v2241 = vand.u32 %v275, 4294901760
        %v2242 = vsub.f32 %v275, %v2241
        %v2243 = vand.u32 %v2242, 4294901760
        %2244 = vmatpush.msra.mxu0 %v2243
        %v2245 = vand.u32 %v274, 4294901760
        %v2246 = vsub.f32 %v274, %v2245
        %v2247 = vand.u32 %v2246, 4294901760
        %2248 = vmatpush.msra.mxu0 %v2247
        %v2249 = vand.u32 %v273, 4294901760
        %v2250 = vsub.f32 %v273, %v2249
        %v2251 = vand.u32 %v2250, 4294901760
        %2252 = vmatpush.msra.mxu0 %v2251
        %v2253 = vand.u32 %v272, 4294901760
        %v2254 = vsub.f32 %v272, %v2253
        %v2255 = vand.u32 %v2254, 4294901760
        %2256 = vmatpush.msra.mxu0 %v2255
        %v2257 = vand.u32 %v271, 4294901760
        %v2258 = vsub.f32 %v271, %v2257
        %v2259 = vand.u32 %v2258, 4294901760
        %2260 = vmatpush.msra.mxu0 %v2259
        %v2261 = vand.u32 %v270, 4294901760
        %v2262 = vsub.f32 %v270, %v2261
        %v2263 = vand.u32 %v2262, 4294901760
        %2264 = vmatpush.msra.mxu0 %v2263
        %v2265 = vand.u32 %v269, 4294901760
        %v2266 = vsub.f32 %v269, %v2265
        %v2267 = vand.u32 %v2266, 4294901760
        %2268 = vmatpush.msra.mxu0 %v2267
        %v2269 = vand.u32 %v268, 4294901760
        %v2270 = vsub.f32 %v268, %v2269
        %v2271 = vand.u32 %v2270, 4294901760
        %2272 = vmatpush.msra.mxu0 %v2271
        %v2273 = vand.u32 %v267, 4294901760
        %v2274 = vsub.f32 %v267, %v2273
        %v2275 = vand.u32 %v2274, 4294901760
        %2276 = vmatpush.msra.mxu0 %v2275
        %v2277 = vand.u32 %v266, 4294901760
        %v2278 = vsub.f32 %v266, %v2277
        %v2279 = vand.u32 %v2278, 4294901760
        %2280 = vmatpush.msra.mxu0 %v2279
        %v2281 = vand.u32 %v265, 4294901760
        %v2282 = vsub.f32 %v265, %v2281
        %v2283 = vand.u32 %v2282, 4294901760
        %2284 = vmatpush.msra.mxu0 %v2283
        %v2285 = vand.u32 %v184, 4294901760
        %2286 = vmatmul.f32.gmra.mxu0 %v2285
        %v2287 = vpop.f32.mrf.mxu0
        %v2288 = vadd.f32 %v2219, %v2287
        %2289 = vdwg.mxu0
        %v2290 = vand.u32 %v280, 4294901760
        %2291 = vmatpush.msra.mxu0 %v2290
        %v2292 = vand.u32 %v279, 4294901760
        %2293 = vmatpush.msra.mxu0 %v2292
        %v2294 = vand.u32 %v278, 4294901760
        %2295 = vmatpush.msra.mxu0 %v2294
        %v2296 = vand.u32 %v277, 4294901760
        %2297 = vmatpush.msra.mxu0 %v2296
        %v2298 = vand.u32 %v276, 4294901760
        %2299 = vmatpush.msra.mxu0 %v2298
        %v2300 = vand.u32 %v275, 4294901760
        %2301 = vmatpush.msra.mxu0 %v2300
        %v2302 = vand.u32 %v274, 4294901760
        %2303 = vmatpush.msra.mxu0 %v2302
        %v2304 = vand.u32 %v273, 4294901760
        %2305 = vmatpush.msra.mxu0 %v2304
        %v2306 = vand.u32 %v272, 4294901760
        %2307 = vmatpush.msra.mxu0 %v2306
        %v2308 = vand.u32 %v271, 4294901760
        %2309 = vmatpush.msra.mxu0 %v2308
        %v2310 = vand.u32 %v270, 4294901760
        %2311 = vmatpush.msra.mxu0 %v2310
        %v2312 = vand.u32 %v269, 4294901760
        %2313 = vmatpush.msra.mxu0 %v2312
        %v2314 = vand.u32 %v268, 4294901760
        %2315 = vmatpush.msra.mxu0 %v2314
        %v2316 = vand.u32 %v267, 4294901760
        %2317 = vmatpush.msra.mxu0 %v2316
        %v2318 = vand.u32 %v266, 4294901760
        %2319 = vmatpush.msra.mxu0 %v2318
        %v2320 = vand.u32 %v265, 4294901760
        %2321 = vmatpush.msra.mxu0 %v2320
        %v2322 = vand.u32 %v184, 4294901760
        %2323 = vmatmul.f32.gmra.mxu0 %v2322
        %v2324 = vpop.f32.mrf.mxu0
        %v2325 = vadd.f32 %v2288, %v2324
        %2326 = vdwg.mxu0
        %v2327 = vmax.f32 %v2325, 0.0
        %v2328 = vxor.u32 %v2327, 2147483648
        %v2329 = vmul.f32 %v2328, 1.442695
        %v2330 = vpow.pop %v2329
        %v2331 = vadd.f32 %v2330, 1.0
        %v2332 = vrcp.pop %v2331
        %v2333 = vmul.f32 %v2331, %v2332
        %v2334 = vsub.f32 1.0, %v2333
        %v2335 = vmul.f32 %v2332, %v2334
        %v2336 = vadd.f32 %v2332, %v2335
        %vm2337 = vweird.f32 %v2331
        %vm2338 = vweird.f32 %v2332
        %vm2339 = vmor %vm2337, %vm2338
        %v2340 = vsel %vm2339, %v2332, %v2336
        %v2341 = vand.u32 2147483647, %v2331
        %vm2342 = vcmp.eq.f32.partialorder %v2341, 8.507059e+37
        %v2343 = vand.u32 %v2331, 2147483648
        %v2344 = vor.u32 1.1754944e-38, %v2343
        %v2345 = vsel %vm2342, %v2344, %v2340
        %v2346 = vmul.f32 1.0, %v2345
        %vm2347 = vcmask 15360
        %2348 = vst.msk [vmem:[%s178] sm:$0xff] %vm2347, %v2346
        %p2349 = scmp.lt.s32.totalorder %s17, 1
        %s2350 = scalar_select %p2349, %s17, 1
        %s2351 = smul.addr %s2350, 8
        %s2352 = scalar_lea.vmem %s2, %s2351
        // Predicated region
        $region37: #{tpu_custom_call.1} parent=27 // pred_check
          %p2353 = pneg %p82
        $region38: #{tpu_custom_call.1} parent=27 // pred_check_branch
          %2355 = sbr.rel (%p2353) target = $region40
        $region39: #{tpu_custom_call.1} parent=27 // pred_region
          _
        $region40: #{tpu_custom_call.1} parent=27 // pred_fallthru
          _
      $region28: #{tpu_custom_call.1} parent=5 // pred_fallthru
        _
      %p2356 = scmp.le.s32.totalorder 2, %s12
      // Predicated region
      $region41: #{tpu_custom_call.1} parent=5 // pred_check
        %p2357 = pneg %p2356
      $region42: #{tpu_custom_call.1} parent=5 // pred_check_branch
        %2359 = sbr.rel (%p2357) target = $region44
      $region43: #{tpu_custom_call.1} parent=5 // pred_region
        %s2360 = ssub.s32 %s12, 2
        // Predicated region
        $region45: #{tpu_custom_call.1} parent=43 // pred_check
          %p2361 = pneg %p88
        $region46: #{tpu_custom_call.1} parent=43 // pred_check_branch
          %2363 = sbr.rel (%p2361) target = $region48
        $region47: #{tpu_custom_call.1} parent=43 // pred_region
          %p2364 = scmp.lt.s32.totalorder %s18, 1
          %s2365 = scalar_select %p2364, %s18, 1
          %s2366 = smul.addr %s2365, 8
          %s2367 = scalar_lea.vmem %s2, %s2366
        $region48: #{tpu_custom_call.1} parent=43 // pred_fallthru
          _
      $region44: #{tpu_custom_call.1} parent=5 // pred_fallthru
        _
    $region6: #{tpu_custom_call.1} parent=1 // loop_footer
      %s16 = sadd.s32 1, %s12
    $region7: #{tpu_custom_call.1} parent=1 // loop_footer_branch
      %11 = sbr.rel target = $region3
    $region8: #{tpu_custom_call.1} parent=1 // loop_exit
      _
    %2368 = vsyncpa [#allocation3], 1
    %s2369 = scalar_lea.sflag [#allocation3], 1
    %2370 = vsyncpa %s2369, 1
    %2371 = vsyncpa [#allocation5], 1

</llo_original>
